<compile_context>
chip_gen: v6e
topology: v6e:2x2x1
jax: 0.10.0
libtpu: 0.0.40
codegen_flags: <defaults>
</compile_context>

<pallas_src>
import numpy as np
import jax
import jax.numpy as jnp
from jax import lax
from jax.experimental import pallas as pl
from jax.experimental.pallas import tpu as pltpu

# ---- Small shapes consistent with the module's forward ----
LATENT_DIM = 32
CONV_OUT_LEN = 8                     # L3 from the encoder
FLATTENED = 16 * CONV_OUT_LEN        # 128
OUT_CH = 8                           # output_channels
ORIG_LEN = 30                        # original_length (final_length = 4*L3 = 32)
BATCH = 2

L3 = CONV_OUT_LEN
L1 = 2 * L3                          # 16  (after upsample1)
L2 = 4 * L3                          # 32  (after upsample2)
GAP1 = 8                             # zero rows between batches, stage-1 stack
GAP2 = 8                             # zero rows between batches, stage-2/3 stacks

# Stacked, zero-separated padded layouts (batch along the time/sublane axis):
R1P = 2 + BATCH * L1 + (BATCH - 1) * GAP1    # 42 padded rows into conv_up1
R1O = R1P - 2                                # 40 conv_up1 output rows
R2P = 2 + BATCH * L2 + (BATCH - 1) * GAP2    # 74 padded rows into conv_up2/final
R2O = R2P - 2                                # 72 conv output rows

OUT_LANES = 128                      # lane-padded channel width everywhere

# Batch-1 row origins inside the stacks / conv outputs.
X2_B1 = 1 + L2 + GAP2                # 41: first batch-1 data row in x2p/x3p
Y_B1 = L2 + GAP2                     # 40: first batch-1 row in y2/y3


# ---- Constant-slab layout (all offsets multiples of 8 rows) ----
def _pad8(n):
    return -(-n // 8) * 8


WFC_OFF = 0                                   # (LATENT_DIM, 128) permuted fc weight
BFC_OFF = WFC_OFF + _pad8(LATENT_DIM)         # 32:   (1, 128) permuted fc bias
M1B0_OFF = BFC_OFF + 8                        # 40:   (R1P, 128) batch-0 lane-block mask
M1B1_OFF = M1B0_OFF + _pad8(R1P)              # 88:   (R1P, 128) batch-1 lane-block mask
V16_OFF = M1B1_OFF + _pad8(R1P)               # 136:  (128, 128) fold lane block -> channels
U2S_OFF = V16_OFF + FLATTENED                 # 264:  (R2P, R1O) upsample2 + re-pad matrix
W1_OFF = U2S_OFF + _pad8(R2P)                 # 344:  3 x (128, 128) conv_up1 taps
B1_OFF = W1_OFF + 3 * 128                     # 728
W2_OFF = B1_OFF + 8                           # 736:  3 x (128, 128) conv_up2 taps
B2_OFF = W2_OFF + 3 * 128                     # 1120
W3_OFF = B2_OFF + 8                           # 1128: 3 x (128, 128) conv_final taps
B3_OFF = W3_OFF + 3 * 128                     # 1512
SLAB_ROWS = B3_OFF + 8                        # 1520 rows x 128 lanes f32 (~760 KiB)


def decoder_kernel(z_ref, c_ref, o_ref, x1p_s, x2p_s, x3p_s):
    f32 = jnp.float32

    def cblk(off, rows):
        return c_ref[pl.ds(off, rows), :]

    # ---- fc for the whole batch: (B, latent) @ (latent, 128) ----
    # Columns pre-permuted to (l, c) order: h[b, l*16 + c] = fc(z)[b, c*L3 + l].
    h = (jnp.dot(z_ref[...], cblk(WFC_OFF, LATENT_DIM), preferred_element_type=f32)
         + cblk(BFC_OFF, 1))                                            # (B, 128)

    # ---- fused view(16, L3) -> channels-last + nearest x2 upsample + batch
    #      stacking: per-batch lane-block masks replicate/select the l = t//2
    #      block on each data row (VPU); v16 folds that block onto channels.
    hbm = (cblk(M1B0_OFF, R1P) * h[0:1, :]
           + cblk(M1B1_OFF, R1P) * h[1:2, :])                           # (R1P, 128)
    x1p_s[...] = jnp.dot(hbm, cblk(V16_OFF, FLATTENED),
                         preferred_element_type=f32)                    # (R1P, 128)

    # ---- k=3 conv as three shifted-slice tap matmuls (lane-padded weights) ----
    def conv3(xp_ref, rows, w_off, b_off):
        t0 = jnp.dot(xp_ref[pl.ds(0, rows), :], cblk(w_off, 128),
                     preferred_element_type=f32)
        t1 = jnp.dot(xp_ref[pl.ds(1, rows), :], cblk(w_off + 128, 128),
                     preferred_element_type=f32)
        t2 = jnp.dot(xp_ref[pl.ds(2, rows), :], cblk(w_off + 256, 128),
                     preferred_element_type=f32)
        return (t0 + t1) + (t2 + cblk(b_off, 1))

    # conv_up1 (16 -> 32, k=3, pad=1) + ReLU on the stacked sequences
    y1 = jnp.maximum(conv3(x1p_s, R1O, W1_OFF, B1_OFF), 0.0)            # (R1O, 128)

    # ---- upsample2 (nearest x2) + re-pad + drop batch-boundary junk rows,
    #      one matmul against the precomputed 0/1 matrix U2s ----
    x2p_s[...] = jnp.dot(c_ref[pl.ds(U2S_OFF, R2P), pl.ds(0, R1O)], y1,
                         preferred_element_type=f32)                    # (R2P, 128)

    # conv_up2 (32 -> 32, k=3, pad=1) + ReLU
    y2 = jnp.maximum(conv3(x2p_s, R2O, W2_OFF, B2_OFF), 0.0)            # (R2O, 128)

    # ---- re-pad for conv_final WITHOUT a matmul: zero the pad/gap rows once,
    #      then copy each batch's y2 segment (sublane-aligned sources) ----
    x3p_s[...] = jnp.zeros_like(x3p_s)
    x3p_s[pl.ds(1, L2), :] = y2[0:L2, :]                   # batch 0 -> rows 1..32
    x3p_s[pl.ds(X2_B1, L2), :] = y2[Y_B1:Y_B1 + L2, :]     # batch 1 -> rows 41..72

    # conv_final (32 -> OUT_CH, k=3, pad=1); output channels lane-padded to 128
    y3 = conv3(x3p_s, R2O, W3_OFF, B3_OFF)                              # (R2O, 128)

    # ---- per-batch output rows (aligned value slices), dense (32,128) stores ----
    o_ref[0, :, :] = y3[0:L2, :]
    o_ref[1, :, :] = y3[Y_B1:Y_B1 + L2, :]


def reconstruction_decoder(z, const_slab):
    out = pl.pallas_call(
        decoder_kernel,
        out_shape=jax.ShapeDtypeStruct((BATCH, L2, OUT_LANES), jnp.float32),
        grid_spec=pltpu.PrefetchScalarGridSpec(
            num_scalar_prefetch=0,
            grid=(1,),                               # single step: whole batch at once
            in_specs=[
                pl.BlockSpec((BATCH, LATENT_DIM), lambda i: (0, 0)),      # z
                pl.BlockSpec((SLAB_ROWS, OUT_LANES), lambda i: (0, 0)),   # packed constants
            ],
            out_specs=pl.BlockSpec((BATCH, L2, OUT_LANES), lambda i: (0, 0, 0)),
            scratch_shapes=[
                pltpu.VMEM((R1P, OUT_LANES), jnp.float32),   # padded input to conv_up1
                pltpu.VMEM((R2P, OUT_LANES), jnp.float32),   # padded input to conv_up2
                pltpu.VMEM((R2P, OUT_LANES), jnp.float32),   # padded input to conv_final
            ],
        ),
        compiler_params=pltpu.CompilerParams(dimension_semantics=("arbitrary",)),
    )(z, const_slab)

    # Single wrapper op: crop to ORIG_LEN, drop lane padding, transpose to NCL.
    return jnp.transpose(out[:, :ORIG_LEN, :OUT_CH], (0, 2, 1))


def init_params(key):
    ks = jax.random.split(key, 8)
    return dict(
        fc_w=jax.random.normal(ks[0], (FLATTENED, LATENT_DIM), jnp.float32) * 0.1,
        fc_b=jax.random.normal(ks[1], (FLATTENED,), jnp.float32) * 0.1,
        w1=jax.random.normal(ks[2], (32, 16, 3), jnp.float32) * 0.1,
        b1=jax.random.normal(ks[3], (32,), jnp.float32) * 0.1,
        w2=jax.random.normal(ks[4], (32, 32, 3), jnp.float32) * 0.1,
        b2=jax.random.normal(ks[5], (32,), jnp.float32) * 0.1,
        w3=jax.random.normal(ks[6], (OUT_CH, 32, 3), jnp.float32) * 0.1,
        b3=jax.random.normal(ks[7], (OUT_CH,), jnp.float32) * 0.1,
    )


def pack_kernel_params(p):
    """Pack all decoder constants into one lane-dense (SLAB_ROWS, 128) f32 slab."""
    slab = np.zeros((SLAB_ROWS, OUT_LANES), np.float32)

    # fc weight/bias, column-permuted so h[b, l*16 + c] == (z @ fc_w.T + fc_b)[b, c*L3 + l]
    fc_w = np.asarray(p["fc_w"])
    fc_b = np.asarray(p["fc_b"])
    wfc_p = (fc_w.reshape(16, L3, LATENT_DIM)
             .transpose(1, 0, 2).reshape(FLATTENED, LATENT_DIM).T)       # (32, 128)
    slab[WFC_OFF:WFC_OFF + LATENT_DIM, :FLATTENED] = wfc_p
    slab[BFC_OFF, :FLATTENED] = fc_b.reshape(16, L3).T.reshape(FLATTENED)

    # Per-batch lane-block masks: batch b's data rows in the stage-1 stack select
    # the l = t//2 lane block (nearest x2 upsample); pad/gap rows stay zero.
    for b, off in ((0, M1B0_OFF), (1, M1B1_OFF)):
        base = 1 + b * (L1 + GAP1)
        for t in range(L1):
            l = t // 2
            slab[off + base + t, l * 16:(l + 1) * 16] = 1.0

    # v16: fold the lane block back onto the channel axis (output lanes >=16 zero).
    slab[V16_OFF + np.arange(FLATTENED), np.arange(FLATTENED) % 16] = 1.0

    # U2s: conv_up1 output rows -> stage-2 padded stack, performing the nearest
    # x2 upsample, inserting the zero pad/gap rows, and skipping the junk rows.
    for b in range(BATCH):
        src = b * (L1 + GAP1)            # first y1 row of batch b
        dst = 1 + b * (L2 + GAP2)        # first x2p data row of batch b
        for t in range(L2):
            slab[U2S_OFF + dst + t, src + t // 2] = 1.0

    # Conv weights (Cout, Cin, K) -> per-tap (Cin, Cout), zero-padded to (128, 128);
    # biases zero-padded to (1, 128).
    def put_conv(w, b, w_off, b_off):
        w = np.asarray(w)
        cout, cin, _ = w.shape
        for t in range(3):
            slab[w_off + t * 128: w_off + t * 128 + cin, :cout] = w[:, :, t].T
        slab[b_off, :cout] = np.asarray(b)

    put_conv(p["w1"], p["b1"], W1_OFF, B1_OFF)
    put_conv(p["w2"], p["b2"], W2_OFF, B2_OFF)
    put_conv(p["w3"], p["b3"], W3_OFF, B3_OFF)

    return jnp.asarray(slab)


def reference(z, p):
    # Plain-JAX replica of the PyTorch forward (NCL layout).
    h = z @ p["fc_w"].T + p["fc_b"]
    x = h.reshape(BATCH, 16, L3)
    x = jnp.repeat(x, 2, axis=2)

    def conv(x, w, b):
        y = lax.conv_general_dilated(x, w, window_strides=(1,), padding=[(1, 1)],
                                     dimension_numbers=("NCH", "OIH", "NCH"))
        return y + b[None, :, None]

    x = jax.nn.relu(conv(x, p["w1"], p["b1"]))
    x = jnp.repeat(x, 2, axis=2)
    x = jax.nn.relu(conv(x, p["w2"], p["b2"]))
    x = conv(x, p["w3"], p["b3"])
    return x[:, :, :ORIG_LEN]


if __name__ == "__main__":
    key = jax.random.PRNGKey(0)
    kz, kp = jax.random.split(key)
    z = jax.random.normal(kz, (BATCH, LATENT_DIM), jnp.float32)
    params = init_params(kp)
    const_slab = pack_kernel_params(params)

    out = reconstruction_decoder(z, const_slab)
    out = jax.block_until_ready(out)

    assert out.shape == (BATCH, OUT_CH, ORIG_LEN), out.shape
    ref = reference(z, params)
    err = float(jnp.max(jnp.abs(out - ref)))
    if err > 1e-4:
        raise AssertionError(f"Pallas output mismatch vs reference: max abs err {err}")
    print("KERNEL_OK")
</pallas_src>

<mosaic_0001>
module attributes {stable_mosaic.version = 11 : i64} {
  func.func @decoder_kernel(%arg0: i32, %arg1: memref<2x32xf32, #tpu.memory_space<vmem>>, %arg2: memref<1520x128xf32, #tpu.memory_space<vmem>>, %arg3: memref<2x32x128xf32, #tpu.memory_space<vmem>>, %arg4: memref<42x128xf32, #tpu.memory_space<vmem>>, %arg5: memref<74x128xf32, #tpu.memory_space<vmem>>, %arg6: memref<74x128xf32, #tpu.memory_space<vmem>>) attributes {dimension_semantics = [#tpu.dimension_semantics<arbitrary>], iteration_bounds = array<i64: 1>, scalar_prefetch = 0 : i64, scratch_operands = 3 : i64, tpu.core_type = #tpu.core_type<tc>, window_params = [{pipeline_mode = #tpu.pipeline_mode<synchronous>, transform_indices = @transform_0, window_bounds = array<i64: 2, 32>}, {pipeline_mode = #tpu.pipeline_mode<synchronous>, transform_indices = @transform_1, window_bounds = array<i64: 1520, 128>}, {pipeline_mode = #tpu.pipeline_mode<synchronous>, transform_indices = @transform_2, window_bounds = array<i64: 2, 32, 128>}]} {
    %c0 = arith.constant 0 : index
    %c0_0 = arith.constant 0 : index
    %0 = vector.load %arg1[%c0, %c0_0] : memref<2x32xf32, #tpu.memory_space<vmem>>, vector<2x32xf32>
    %c0_1 = arith.constant 0 : index
    %c0_2 = arith.constant 0 : index
    %1 = vector.load %arg2[%c0_1, %c0_2] : memref<1520x128xf32, #tpu.memory_space<vmem>>, vector<32x128xf32>
    %cst = arith.constant dense<0.000000e+00> : vector<2x128xf32>
    %2 = tpu.matmul %0, %1, %cst {dimension_numbers = #tpu.dot_dimension_numbers<[1], [0], [0], [1], [0, 0, 1, 1], [], []>} : vector<2x32xf32>, vector<32x128xf32>, vector<2x128xf32> -> vector<2x128xf32>
    %c32 = arith.constant 32 : index
    %c0_3 = arith.constant 0 : index
    %3 = vector.load %arg2[%c32, %c0_3] : memref<1520x128xf32, #tpu.memory_space<vmem>>, vector<1x128xf32>
    %4 = vector.broadcast %3 : vector<1x128xf32> to vector<2x128xf32>
    %5 = arith.addf %2, %4 : vector<2x128xf32>
    %c40 = arith.constant 40 : index
    %c0_4 = arith.constant 0 : index
    %6 = vector.load %arg2[%c40, %c0_4] : memref<1520x128xf32, #tpu.memory_space<vmem>>, vector<42x128xf32>
    %7 = vector.extract_strided_slice %5 {offsets = [0, 0], sizes = [1, 128], strides = [1, 1]} : vector<2x128xf32> to vector<1x128xf32>
    %8 = vector.broadcast %7 : vector<1x128xf32> to vector<42x128xf32>
    %9 = arith.mulf %6, %8 : vector<42x128xf32>
    %c88 = arith.constant 88 : index
    %c0_5 = arith.constant 0 : index
    %10 = vector.load %arg2[%c88, %c0_5] : memref<1520x128xf32, #tpu.memory_space<vmem>>, vector<42x128xf32>
    %11 = vector.extract_strided_slice %5 {offsets = [1, 0], sizes = [1, 128], strides = [1, 1]} : vector<2x128xf32> to vector<1x128xf32>
    %12 = vector.broadcast %11 : vector<1x128xf32> to vector<42x128xf32>
    %13 = arith.mulf %10, %12 : vector<42x128xf32>
    %14 = arith.addf %9, %13 : vector<42x128xf32>
    %c136 = arith.constant 136 : index
    %c0_6 = arith.constant 0 : index
    %15 = vector.load %arg2[%c136, %c0_6] : memref<1520x128xf32, #tpu.memory_space<vmem>>, vector<128x128xf32>
    %cst_7 = arith.constant dense<0.000000e+00> : vector<42x128xf32>
    %16 = tpu.matmul %14, %15, %cst_7 {dimension_numbers = #tpu.dot_dimension_numbers<[1], [0], [0], [1], [0, 0, 1, 1], [], []>} : vector<42x128xf32>, vector<128x128xf32>, vector<42x128xf32> -> vector<42x128xf32>
    %c0_8 = arith.constant 0 : index
    %c0_9 = arith.constant 0 : index
    %17 = vector.load %arg4[%c0_8, %c0_9] : memref<42x128xf32, #tpu.memory_space<vmem>>, vector<42x128xf32>
    tpu.vector_store %arg4[%c0_8, %c0_9], %16 {strides = array<i32>} : memref<42x128xf32, #tpu.memory_space<vmem>>, vector<42x128xf32>,
    %c0_10 = arith.constant 0 : index
    %c0_11 = arith.constant 0 : index
    %18 = vector.load %arg4[%c0_10, %c0_11] : memref<42x128xf32, #tpu.memory_space<vmem>>, vector<40x128xf32>
    %c344 = arith.constant 344 : index
    %c0_12 = arith.constant 0 : index
    %19 = vector.load %arg2[%c344, %c0_12] : memref<1520x128xf32, #tpu.memory_space<vmem>>, vector<128x128xf32>
    %cst_13 = arith.constant dense<0.000000e+00> : vector<40x128xf32>
    %20 = tpu.matmul %18, %19, %cst_13 {dimension_numbers = #tpu.dot_dimension_numbers<[1], [0], [0], [1], [0, 0, 1, 1], [], []>} : vector<40x128xf32>, vector<128x128xf32>, vector<40x128xf32> -> vector<40x128xf32>
    %c1 = arith.constant 1 : index
    %c0_14 = arith.constant 0 : index
    %21 = vector.load %arg4[%c1, %c0_14] : memref<42x128xf32, #tpu.memory_space<vmem>>, vector<40x128xf32>
    %c472 = arith.constant 472 : index
    %c0_15 = arith.constant 0 : index
    %22 = vector.load %arg2[%c472, %c0_15] : memref<1520x128xf32, #tpu.memory_space<vmem>>, vector<128x128xf32>
    %cst_16 = arith.constant dense<0.000000e+00> : vector<40x128xf32>
    %23 = tpu.matmul %21, %22, %cst_16 {dimension_numbers = #tpu.dot_dimension_numbers<[1], [0], [0], [1], [0, 0, 1, 1], [], []>} : vector<40x128xf32>, vector<128x128xf32>, vector<40x128xf32> -> vector<40x128xf32>
    %c2 = arith.constant 2 : index
    %c0_17 = arith.constant 0 : index
    %24 = vector.load %arg4[%c2, %c0_17] : memref<42x128xf32, #tpu.memory_space<vmem>>, vector<40x128xf32>
    %c600 = arith.constant 600 : index
    %c0_18 = arith.constant 0 : index
    %25 = vector.load %arg2[%c600, %c0_18] : memref<1520x128xf32, #tpu.memory_space<vmem>>, vector<128x128xf32>
    %cst_19 = arith.constant dense<0.000000e+00> : vector<40x128xf32>
    %26 = tpu.matmul %24, %25, %cst_19 {dimension_numbers = #tpu.dot_dimension_numbers<[1], [0], [0], [1], [0, 0, 1, 1], [], []>} : vector<40x128xf32>, vector<128x128xf32>, vector<40x128xf32> -> vector<40x128xf32>
    %27 = arith.addf %20, %23 : vector<40x128xf32>
    %c728 = arith.constant 728 : index
    %c0_20 = arith.constant 0 : index
    %28 = vector.load %arg2[%c728, %c0_20] : memref<1520x128xf32, #tpu.memory_space<vmem>>, vector<1x128xf32>
    %29 = vector.broadcast %28 : vector<1x128xf32> to vector<40x128xf32>
    %30 = arith.addf %26, %29 : vector<40x128xf32>
    %31 = arith.addf %27, %30 : vector<40x128xf32>
    %cst_21 = arith.constant 0.000000e+00 : f32
    %32 = vector.broadcast %cst_21 : f32 to vector<40x128xf32>
    %33 = arith.maximumf %31, %32 : vector<40x128xf32>
    %c264 = arith.constant 264 : index
    %c0_22 = arith.constant 0 : index
    %34 = vector.load %arg2[%c264, %c0_22] : memref<1520x128xf32, #tpu.memory_space<vmem>>, vector<74x40xf32>
    %cst_23 = arith.constant dense<0.000000e+00> : vector<74x128xf32>
    %35 = tpu.matmul %34, %33, %cst_23 {dimension_numbers = #tpu.dot_dimension_numbers<[1], [0], [0], [1], [0, 0, 1, 1], [], []>} : vector<74x40xf32>, vector<40x128xf32>, vector<74x128xf32> -> vector<74x128xf32>
    %c0_24 = arith.constant 0 : index
    %c0_25 = arith.constant 0 : index
    %36 = vector.load %arg5[%c0_24, %c0_25] : memref<74x128xf32, #tpu.memory_space<vmem>>, vector<74x128xf32>
    tpu.vector_store %arg5[%c0_24, %c0_25], %35 {strides = array<i32>} : memref<74x128xf32, #tpu.memory_space<vmem>>, vector<74x128xf32>,
    %c0_26 = arith.constant 0 : index
    %c0_27 = arith.constant 0 : index
    %37 = vector.load %arg5[%c0_26, %c0_27] : memref<74x128xf32, #tpu.memory_space<vmem>>, vector<72x128xf32>
    %c736 = arith.constant 736 : index
    %c0_28 = arith.constant 0 : index
    %38 = vector.load %arg2[%c736, %c0_28] : memref<1520x128xf32, #tpu.memory_space<vmem>>, vector<128x128xf32>
    %cst_29 = arith.constant dense<0.000000e+00> : vector<72x128xf32>
    %39 = tpu.matmul %37, %38, %cst_29 {dimension_numbers = #tpu.dot_dimension_numbers<[1], [0], [0], [1], [0, 0, 1, 1], [], []>} : vector<72x128xf32>, vector<128x128xf32>, vector<72x128xf32> -> vector<72x128xf32>
    %c1_30 = arith.constant 1 : index
    %c0_31 = arith.constant 0 : index
    %40 = vector.load %arg5[%c1_30, %c0_31] : memref<74x128xf32, #tpu.memory_space<vmem>>, vector<72x128xf32>
    %c864 = arith.constant 864 : index
    %c0_32 = arith.constant 0 : index
    %41 = vector.load %arg2[%c864, %c0_32] : memref<1520x128xf32, #tpu.memory_space<vmem>>, vector<128x128xf32>
    %cst_33 = arith.constant dense<0.000000e+00> : vector<72x128xf32>
    %42 = tpu.matmul %40, %41, %cst_33 {dimension_numbers = #tpu.dot_dimension_numbers<[1], [0], [0], [1], [0, 0, 1, 1], [], []>} : vector<72x128xf32>, vector<128x128xf32>, vector<72x128xf32> -> vector<72x128xf32>
    %c2_34 = arith.constant 2 : index
    %c0_35 = arith.constant 0 : index
    %43 = vector.load %arg5[%c2_34, %c0_35] : memref<74x128xf32, #tpu.memory_space<vmem>>, vector<72x128xf32>
    %c992 = arith.constant 992 : index
    %c0_36 = arith.constant 0 : index
    %44 = vector.load %arg2[%c992, %c0_36] : memref<1520x128xf32, #tpu.memory_space<vmem>>, vector<128x128xf32>
    %cst_37 = arith.constant dense<0.000000e+00> : vector<72x128xf32>
    %45 = tpu.matmul %43, %44, %cst_37 {dimension_numbers = #tpu.dot_dimension_numbers<[1], [0], [0], [1], [0, 0, 1, 1], [], []>} : vector<72x128xf32>, vector<128x128xf32>, vector<72x128xf32> -> vector<72x128xf32>
    %46 = arith.addf %39, %42 : vector<72x128xf32>
    %c1120 = arith.constant 1120 : index
    %c0_38 = arith.constant 0 : index
    %47 = vector.load %arg2[%c1120, %c0_38] : memref<1520x128xf32, #tpu.memory_space<vmem>>, vector<1x128xf32>
    %48 = vector.broadcast %47 : vector<1x128xf32> to vector<72x128xf32>
    %49 = arith.addf %45, %48 : vector<72x128xf32>
    %50 = arith.addf %46, %49 : vector<72x128xf32>
    %cst_39 = arith.constant 0.000000e+00 : f32
    %51 = vector.broadcast %cst_39 : f32 to vector<72x128xf32>
    %52 = arith.maximumf %50, %51 : vector<72x128xf32>
    %cst_40 = arith.constant 0.000000e+00 : f32
    %53 = vector.broadcast %cst_40 : f32 to vector<74x128xf32>
    %c0_41 = arith.constant 0 : index
    %c0_42 = arith.constant 0 : index
    %54 = vector.load %arg6[%c0_41, %c0_42] : memref<74x128xf32, #tpu.memory_space<vmem>>, vector<74x128xf32>
    tpu.vector_store %arg6[%c0_41, %c0_42], %53 {strides = array<i32>} : memref<74x128xf32, #tpu.memory_space<vmem>>, vector<74x128xf32>,
    %55 = vector.extract_strided_slice %52 {offsets = [0, 0], sizes = [32, 128], strides = [1, 1]} : vector<72x128xf32> to vector<32x128xf32>
    %c1_43 = arith.constant 1 : index
    %c0_44 = arith.constant 0 : index
    %56 = vector.load %arg6[%c1_43, %c0_44] : memref<74x128xf32, #tpu.memory_space<vmem>>, vector<32x128xf32>
    tpu.vector_store %arg6[%c1_43, %c0_44], %55 {strides = array<i32>} : memref<74x128xf32, #tpu.memory_space<vmem>>, vector<32x128xf32>,
    %57 = vector.extract_strided_slice %52 {offsets = [40, 0], sizes = [32, 128], strides = [1, 1]} : vector<72x128xf32> to vector<32x128xf32>
    %c41 = arith.constant 41 : index
    %c0_45 = arith.constant 0 : index
    %58 = vector.load %arg6[%c41, %c0_45] : memref<74x128xf32, #tpu.memory_space<vmem>>, vector<32x128xf32>
    tpu.vector_store %arg6[%c41, %c0_45], %57 {strides = array<i32>} : memref<74x128xf32, #tpu.memory_space<vmem>>, vector<32x128xf32>,
    %c0_46 = arith.constant 0 : index
    %c0_47 = arith.constant 0 : index
    %59 = vector.load %arg6[%c0_46, %c0_47] : memref<74x128xf32, #tpu.memory_space<vmem>>, vector<72x128xf32>
    %c1128 = arith.constant 1128 : index
    %c0_48 = arith.constant 0 : index
    %60 = vector.load %arg2[%c1128, %c0_48] : memref<1520x128xf32, #tpu.memory_space<vmem>>, vector<128x128xf32>
    %cst_49 = arith.constant dense<0.000000e+00> : vector<72x128xf32>
    %61 = tpu.matmul %59, %60, %cst_49 {dimension_numbers = #tpu.dot_dimension_numbers<[1], [0], [0], [1], [0, 0, 1, 1], [], []>} : vector<72x128xf32>, vector<128x128xf32>, vector<72x128xf32> -> vector<72x128xf32>
    %c1_50 = arith.constant 1 : index
    %c0_51 = arith.constant 0 : index
    %62 = vector.load %arg6[%c1_50, %c0_51] : memref<74x128xf32, #tpu.memory_space<vmem>>, vector<72x128xf32>
    %c1256 = arith.constant 1256 : index
    %c0_52 = arith.constant 0 : index
    %63 = vector.load %arg2[%c1256, %c0_52] : memref<1520x128xf32, #tpu.memory_space<vmem>>, vector<128x128xf32>
    %cst_53 = arith.constant dense<0.000000e+00> : vector<72x128xf32>
    %64 = tpu.matmul %62, %63, %cst_53 {dimension_numbers = #tpu.dot_dimension_numbers<[1], [0], [0], [1], [0, 0, 1, 1], [], []>} : vector<72x128xf32>, vector<128x128xf32>, vector<72x128xf32> -> vector<72x128xf32>
    %c2_54 = arith.constant 2 : index
    %c0_55 = arith.constant 0 : index
    %65 = vector.load %arg6[%c2_54, %c0_55] : memref<74x128xf32, #tpu.memory_space<vmem>>, vector<72x128xf32>
    %c1384 = arith.constant 1384 : index
    %c0_56 = arith.constant 0 : index
    %66 = vector.load %arg2[%c1384, %c0_56] : memref<1520x128xf32, #tpu.memory_space<vmem>>, vector<128x128xf32>
    %cst_57 = arith.constant dense<0.000000e+00> : vector<72x128xf32>
    %67 = tpu.matmul %65, %66, %cst_57 {dimension_numbers = #tpu.dot_dimension_numbers<[1], [0], [0], [1], [0, 0, 1, 1], [], []>} : vector<72x128xf32>, vector<128x128xf32>, vector<72x128xf32> -> vector<72x128xf32>
    %68 = arith.addf %61, %64 : vector<72x128xf32>
    %c1512 = arith.constant 1512 : index
    %c0_58 = arith.constant 0 : index
    %69 = vector.load %arg2[%c1512, %c0_58] : memref<1520x128xf32, #tpu.memory_space<vmem>>, vector<1x128xf32>
    %70 = vector.broadcast %69 : vector<1x128xf32> to vector<72x128xf32>
    %71 = arith.addf %67, %70 : vector<72x128xf32>
    %72 = arith.addf %68, %71 : vector<72x128xf32>
    %73 = vector.extract_strided_slice %72 {offsets = [0, 0], sizes = [32, 128], strides = [1, 1]} : vector<72x128xf32> to vector<32x128xf32>
    %c0_59 = arith.constant 0 : index
    %c0_60 = arith.constant 0 : index
    %c0_61 = arith.constant 0 : index
    %74 = vector.load %arg3[%c0_59, %c0_60, %c0_61] : memref<2x32x128xf32, #tpu.memory_space<vmem>>, vector<1x32x128xf32>
    %75 = vector.shape_cast %74 : vector<1x32x128xf32> to vector<32x128xf32>
    %76 = vector.shape_cast %73 : vector<32x128xf32> to vector<1x32x128xf32>
    tpu.vector_store %arg3[%c0_59, %c0_60, %c0_61], %76 {strides = array<i32>} : memref<2x32x128xf32, #tpu.memory_space<vmem>>, vector<1x32x128xf32>,
    %77 = vector.extract_strided_slice %72 {offsets = [40, 0], sizes = [32, 128], strides = [1, 1]} : vector<72x128xf32> to vector<32x128xf32>
    %c1_62 = arith.constant 1 : index
    %c0_63 = arith.constant 0 : index
    %c0_64 = arith.constant 0 : index
    %78 = vector.load %arg3[%c1_62, %c0_63, %c0_64] : memref<2x32x128xf32, #tpu.memory_space<vmem>>, vector<1x32x128xf32>
    %79 = vector.shape_cast %78 : vector<1x32x128xf32> to vector<32x128xf32>
    %80 = vector.shape_cast %77 : vector<32x128xf32> to vector<1x32x128xf32>
    tpu.vector_store %arg3[%c1_62, %c0_63, %c0_64], %80 {strides = array<i32>} : memref<2x32x128xf32, #tpu.memory_space<vmem>>, vector<1x32x128xf32>,
    return
  }
  func.func @transform_0(%arg0: i32) -> (i32, i32) {
    %c0_i32 = arith.constant 0 : i32
    %c0_i32_0 = arith.constant 0 : i32
    %c0_i32_1 = arith.constant 0 : i32
    return %c0_i32, %c0_i32_0 : i32, i32
  }
  func.func @transform_1(%arg0: i32) -> (i32, i32) {
    %c0_i32 = arith.constant 0 : i32
    %c0_i32_0 = arith.constant 0 : i32
    %c0_i32_1 = arith.constant 0 : i32
    return %c0_i32, %c0_i32_0 : i32, i32
  }
  func.func @transform_2(%arg0: i32) -> (i32, i32, i32) {
    %c0_i32 = arith.constant 0 : i32
    %c0_i32_0 = arith.constant 0 : i32
    %c0_i32_1 = arith.constant 0 : i32
    %c0_i32_2 = arith.constant 0 : i32
    return %c0_i32, %c0_i32_0, %c0_i32_1 : i32, i32, i32
  }
}

</mosaic_0001>

<llo_original>
// kernel: tpu_custom_call.1
$region0: #{tpu_custom_call.1}
  #allocation0 [shape = 'u32[]', space=smem, size = 0x4, offset = 0x4, fixed_abs, tag = 'smem constant byte address 0x4 - core index']
  #allocation1 [shape = 'u32[144,128]{1,0:T(1,128)}', space=vmem, size = 0x12000, scoped, tag = 'internal scratch']
  #allocation2 [shape = 'f32[42,128]{1,0:T(8,128)}', space=vmem, size = 0x6000, scoped, tag = 'scratch operand']
  #allocation3 [shape = 'f32[74,128]{1,0:T(8,128)}', space=vmem, size = 0xa000, scoped, tag = 'scratch operand']
  #allocation4 [shape = 'f32[74,128]{1,0:T(8,128)}', space=vmem, size = 0xa000, scoped, tag = 'scratch operand']
  %s0 = inlined_call_operand.hbm [shape: f32[2,32], index: 0, kind: input, shape index: {}]
  %s1 = inlined_call_operand.hbm [shape: f32[1520,128], index: 1, kind: input, shape index: {}]
  %s2 = inlined_call_operand.hbm [shape: f32[2,32,128], index: 2, kind: output, shape index: {}]
  %s3 = sld [smem:[#allocation0]]
  $region26: #{tpu_custom_call.1} parent=0
    _
  %s5 = ssub.s32 1, %s3
  %s6 = scalar_select 0, %s5, %s3
  $region1: #{tpu_custom_call.1} parent=0
    #allocation5 [shape = 'u8[1024]{0}', space=vmem, size = 0x400, scoped, tag = 'input window, operand 0, single buffered']
    #allocation6 [shape = 's32[1]{0}', space=sflag, size = 0x4, scoped, tag = 'scoped memory for tpu_custom_call.1']
    #allocation7 [shape = 's32[1]{0}', space=sflag, size = 0x4, scoped, tag = 'scoped memory for tpu_custom_call.1']
    #allocation8 [shape = 'u8[778240]{0}', space=vmem, size = 0xbe000, scoped, tag = 'input window, operand 1, single buffered']
    #allocation9 [shape = 's32[1]{0}', space=sflag, size = 0x4, scoped, tag = 'scoped memory for tpu_custom_call.1']
    #allocation10 [shape = 'u8[32768]{0}', space=vmem, size = 0x8000, scoped, tag = 'output window, operand 0, single buffered']
    %7 = vsyncpa [#allocation6], 0
    %8 = vsyncpa [#allocation9], 0
    %9 = vsyncpa [#allocation7], 0
    // Predicated region
    $region2: #{tpu_custom_call.1} parent=1 // pred_check
      _
    $region3: #{tpu_custom_call.1} parent=1 // pred_check_branch
      %11 = sbr.rel (0) target = $region5
    $region4: #{tpu_custom_call.1} parent=1 // pred_region
      %s13 = ssub.s32 32, 32
      %14 = vsyncadd [#allocation6], %s13
      %s16 = sshll.u32 [#allocation5], 4
      %s17 = int_to_ptr.vmem [resolvable:$true] %s16
      %19 = dma.hbm_to_vmem [thread:$0]  %s0, 32, %s17, [#allocation6]
    $region5: #{tpu_custom_call.1} parent=1 // pred_fallthru
      _
    // Predicated region
    $region6: #{tpu_custom_call.1} parent=1 // pred_check
      _
    $region7: #{tpu_custom_call.1} parent=1 // pred_check_branch
      %21 = sbr.rel (0) target = $region9
    $region8: #{tpu_custom_call.1} parent=1 // pred_region
      %s23 = ssub.s32 24320, 24320
      %24 = vsyncadd [#allocation9], %s23
      %s25 = sshll.u32 [#allocation8], 4
      %s26 = int_to_ptr.vmem [resolvable:$true] %s25
      %31 = dma.hbm_to_vmem [thread:$0]  %s1, 24320, %s26, [#allocation9], 128, 128, 8
    $region9: #{tpu_custom_call.1} parent=1 // pred_fallthru
      _
    // Predicated region
    $region10: #{tpu_custom_call.1} parent=1 // pred_check
      _
    $region11: #{tpu_custom_call.1} parent=1 // pred_check_branch
      %33 = sbr.rel (0) target = $region13
    $region12: #{tpu_custom_call.1} parent=1 // pred_region
      %34 = dma.done [#allocation6], 32
    $region13: #{tpu_custom_call.1} parent=1 // pred_fallthru
      _
    // Predicated region
    $region14: #{tpu_custom_call.1} parent=1 // pred_check
      _
    $region15: #{tpu_custom_call.1} parent=1 // pred_check_branch
      %36 = sbr.rel (0) target = $region17
    $region16: #{tpu_custom_call.1} parent=1 // pred_region
      %37 = dma.done [#allocation9], 24320
    $region17: #{tpu_custom_call.1} parent=1 // pred_fallthru
      _
    %v38 = vld [vmem:[#allocation5] sm:$0x3]
    %v39 = vld [vmem:[#allocation8] sm:$0xff]
    %v40 = vld [vmem:[#allocation8 + $0x8] sm:$0xff]
    %v41 = vld [vmem:[#allocation8 + $0x10] sm:$0xff]
    %v42 = vld [vmem:[#allocation8 + $0x18] sm:$0xff]
    %v43 = vld [vmem:[#allocation8 + $0x20] sm:$0x1]
    %v44 = vlaneseq
    %v45 = vshrl.u32 %v44, 7
    %v46 = vsub.s32 0, %v45
    %v47 = vrot.slane %v43, %v46
    %vm48 = vcmask 261120
    %v50 = vsel %vm48, %v38, 0
    %52 = vmatprep.subr.mxu0 0.0
    %53 = vmatpush1.msra.mxu0 0.0
    %54 = vmatprep.subr.mxu0 0.0
    %55 = vmatpush1.msra.mxu0 0.0
    %56 = vmatprep.subr.mxu0 0.0
    %57 = vmatpush1.msra.mxu0 0.0
    %58 = vmatprep.subr.mxu0 0.0
    %59 = vmatpush1.msra.mxu0 0.0
    %60 = vmatprep.subr.mxu0 0.0
    %61 = vmatpush1.msra.mxu0 0.0
    %62 = vmatprep.subr.mxu0 0.0
    %63 = vmatpush1.msra.mxu0 0.0
    %64 = vmatprep.subr.mxu0 0.0
    %65 = vmatpush1.msra.mxu0 0.0
    %66 = vmatprep.subr.mxu0 0.0
    %67 = vmatpush1.msra.mxu0 0.0
    %68 = vmatprep.subr.mxu0 0.0
    %69 = vmatpush1.msra.mxu0 0.0
    %70 = vmatprep.subr.mxu0 0.0
    %71 = vmatpush1.msra.mxu0 0.0
    %72 = vmatprep.subr.mxu0 0.0
    %73 = vmatpush1.msra.mxu0 0.0
    %74 = vmatprep.subr.mxu0 0.0
    %75 = vmatpush1.msra.mxu0 0.0
    %76 = vmatprep.subr.mxu0 0.0
    %77 = vmatpush1.msra.mxu0 %v42
    %78 = vmatprep.subr.mxu0 0.0
    %79 = vmatpush1.msra.mxu0 %v41
    %80 = vmatprep.subr.mxu0 0.0
    %81 = vmatpush1.msra.mxu0 %v40
    %82 = vmatprep.subr.mxu0 0.0
    %83 = vmatpush1.msra.mxu0 %v39
    %84 = vmatprep.subr.mxu0 0.0
    %85 = vmatpush2.msra.mxu0 0.0
    %86 = vmatprep.subr.mxu0 0.0
    %87 = vmatpush2.msra.mxu0 0.0
    %88 = vmatprep.subr.mxu0 0.0
    %89 = vmatpush2.msra.mxu0 0.0
    %90 = vmatprep.subr.mxu0 0.0
    %91 = vmatpush2.msra.mxu0 0.0
    %92 = vmatprep.subr.mxu0 0.0
    %93 = vmatpush2.msra.mxu0 0.0
    %94 = vmatprep.subr.mxu0 0.0
    %95 = vmatpush2.msra.mxu0 0.0
    %96 = vmatprep.subr.mxu0 0.0
    %97 = vmatpush2.msra.mxu0 0.0
    %98 = vmatprep.subr.mxu0 0.0
    %99 = vmatpush2.msra.mxu0 0.0
    %100 = vmatprep.subr.mxu0 0.0
    %101 = vmatpush2.msra.mxu0 0.0
    %102 = vmatprep.subr.mxu0 0.0
    %103 = vmatpush2.msra.mxu0 0.0
    %104 = vmatprep.subr.mxu0 0.0
    %105 = vmatpush2.msra.mxu0 0.0
    %106 = vmatprep.subr.mxu0 0.0
    %107 = vmatpush2.msra.mxu0 0.0
    %108 = vmatprep.subr.mxu0 0.0
    %109 = vmatpush2.msra.mxu0 0.0
    %110 = vmatprep.subr.mxu0 0.0
    %111 = vmatpush2.msra.mxu0 0.0
    %112 = vmatprep.subr.mxu0 0.0
    %113 = vmatpush2.msra.mxu0 0.0
    %114 = vmatprep.subr.mxu0 0.0
    %115 = vmatpush2.msra.mxu0 0.0
    %116 = vmatprep.mubr.f32.mxu0 0.0
    %117 = vmatmul.mubr.f32.gmra.mxu0 %v50
    %v118 = vpop.f32.mrf.mxu0
    %v119 = vadd.f32 %v47, %v118
    %v120 = vpop.f32.mrf.mxu0
    %121 = vdwg.mxu0
    %v122 = vld [vmem:[#allocation8 + $0x28] sm:$0xff]
    %v123 = vld [vmem:[#allocation8 + $0x30] sm:$0xff]
    %v124 = vld [vmem:[#allocation8 + $0x38] sm:$0xff]
    %v125 = vld [vmem:[#allocation8 + $0x40] sm:$0xff]
    %v126 = vld [vmem:[#allocation8 + $0x48] sm:$0xff]
    %v127 = vld [vmem:[#allocation8 + $0x50] sm:$0x3]
    %v128 = vlaneseq
    %v129 = vshrl.u32 %v128, 7
    %v130 = vsub.s32 0, %v129
    %v131 = vrot.slane %v119, %v130
    %v132 = vmul.f32 %v122, %v131
    %v133 = vmul.f32 %v123, %v131
    %v134 = vmul.f32 %v124, %v131
    %v135 = vmul.f32 %v125, %v131
    %v136 = vmul.f32 %v126, %v131
    %v137 = vmul.f32 %v127, %v131
    %v138 = vld [vmem:[#allocation8 + $0x58] sm:$0xff]
    %v139 = vld [vmem:[#allocation8 + $0x60] sm:$0xff]
    %v140 = vld [vmem:[#allocation8 + $0x68] sm:$0xff]
    %v141 = vld [vmem:[#allocation8 + $0x70] sm:$0xff]
    %v142 = vld [vmem:[#allocation8 + $0x78] sm:$0xff]
    %v143 = vld [vmem:[#allocation8 + $0x80] sm:$0x3]
    %v144 = vlaneseq
    %v145 = vshrl.u32 %v144, 7
    %v146 = vsub.s32 1, %v145
    %v147 = vrot.slane %v119, %v146
    %v148 = vmul.f32 %v138, %v147
    %v149 = vmul.f32 %v139, %v147
    %v150 = vmul.f32 %v140, %v147
    %v151 = vmul.f32 %v141, %v147
    %v152 = vmul.f32 %v142, %v147
    %v153 = vmul.f32 %v143, %v147
    %v154 = vadd.f32 %v132, %v148
    %v155 = vadd.f32 %v133, %v149
    %v156 = vadd.f32 %v134, %v150
    %v157 = vadd.f32 %v135, %v151
    %v158 = vadd.f32 %v136, %v152
    %v159 = vadd.f32 %v137, %v153
    %v160 = vld [vmem:[#allocation8 + $0x88] sm:$0xff]
    %v161 = vld [vmem:[#allocation8 + $0x90] sm:$0xff]
    %v162 = vld [vmem:[#allocation8 + $0x98] sm:$0xff]
    %v163 = vld [vmem:[#allocation8 + $0xa0] sm:$0xff]
    %v164 = vld [vmem:[#allocation8 + $0xa8] sm:$0xff]
    %v165 = vld [vmem:[#allocation8 + $0xb0] sm:$0xff]
    %v166 = vld [vmem:[#allocation8 + $0xb8] sm:$0xff]
    %v167 = vld [vmem:[#allocation8 + $0xc0] sm:$0xff]
    %v168 = vld [vmem:[#allocation8 + $0xc8] sm:$0xff]
    %v169 = vld [vmem:[#allocation8 + $0xd0] sm:$0xff]
    %v170 = vld [vmem:[#allocation8 + $0xd8] sm:$0xff]
    %v171 = vld [vmem:[#allocation8 + $0xe0] sm:$0xff]
    %v172 = vld [vmem:[#allocation8 + $0xe8] sm:$0xff]
    %v173 = vld [vmem:[#allocation8 + $0xf0] sm:$0xff]
    %v174 = vld [vmem:[#allocation8 + $0xf8] sm:$0xff]
    %v175 = vld [vmem:[#allocation8 + $0x100] sm:$0xff]
    %176 = vmatprep.subr.mxu0 0.0
    %177 = vmatpush1.msra.mxu0 %v175
    %178 = vmatprep.subr.mxu0 0.0
    %179 = vmatpush1.msra.mxu0 %v174
    %180 = vmatprep.subr.mxu0 0.0
    %181 = vmatpush1.msra.mxu0 %v173
    %182 = vmatprep.subr.mxu0 0.0
    %183 = vmatpush1.msra.mxu0 %v172
    %184 = vmatprep.subr.mxu0 0.0
    %185 = vmatpush1.msra.mxu0 %v171
    %186 = vmatprep.subr.mxu0 0.0
    %187 = vmatpush1.msra.mxu0 %v170
    %188 = vmatprep.subr.mxu0 0.0
    %189 = vmatpush1.msra.mxu0 %v169
    %190 = vmatprep.subr.mxu0 0.0
    %191 = vmatpush1.msra.mxu0 %v168
    %192 = vmatprep.subr.mxu0 0.0
    %193 = vmatpush1.msra.mxu0 %v167
    %194 = vmatprep.subr.mxu0 0.0
    %195 = vmatpush1.msra.mxu0 %v166
    %196 = vmatprep.subr.mxu0 0.0
    %197 = vmatpush1.msra.mxu0 %v165
    %198 = vmatprep.subr.mxu0 0.0
    %199 = vmatpush1.msra.mxu0 %v164
    %200 = vmatprep.subr.mxu0 0.0
    %201 = vmatpush1.msra.mxu0 %v163
    %202 = vmatprep.subr.mxu0 0.0
    %203 = vmatpush1.msra.mxu0 %v162
    %204 = vmatprep.subr.mxu0 0.0
    %205 = vmatpush1.msra.mxu0 %v161
    %206 = vmatprep.subr.mxu0 0.0
    %207 = vmatpush1.msra.mxu0 %v160
    %208 = vmatprep.subr.mxu0 0.0
    %209 = vmatpush2.msra.mxu0 0.0
    %210 = vmatprep.subr.mxu0 0.0
    %211 = vmatpush2.msra.mxu0 0.0
    %212 = vmatprep.subr.mxu0 0.0
    %213 = vmatpush2.msra.mxu0 0.0
    %214 = vmatprep.subr.mxu0 0.0
    %215 = vmatpush2.msra.mxu0 0.0
    %216 = vmatprep.subr.mxu0 0.0
    %217 = vmatpush2.msra.mxu0 0.0
    %218 = vmatprep.subr.mxu0 0.0
    %219 = vmatpush2.msra.mxu0 0.0
    %220 = vmatprep.subr.mxu0 0.0
    %221 = vmatpush2.msra.mxu0 0.0
    %222 = vmatprep.subr.mxu0 0.0
    %223 = vmatpush2.msra.mxu0 0.0
    %224 = vmatprep.subr.mxu0 0.0
    %225 = vmatpush2.msra.mxu0 0.0
    %226 = vmatprep.subr.mxu0 0.0
    %227 = vmatpush2.msra.mxu0 0.0
    %228 = vmatprep.subr.mxu0 0.0
    %229 = vmatpush2.msra.mxu0 0.0
    %230 = vmatprep.subr.mxu0 0.0
    %231 = vmatpush2.msra.mxu0 0.0
    %232 = vmatprep.subr.mxu0 0.0
    %233 = vmatpush2.msra.mxu0 0.0
    %234 = vmatprep.subr.mxu0 0.0
    %235 = vmatpush2.msra.mxu0 0.0
    %236 = vmatprep.subr.mxu0 0.0
    %237 = vmatpush2.msra.mxu0 0.0
    %238 = vmatprep.subr.mxu0 0.0
    %239 = vmatpush2.msra.mxu0 0.0
    %240 = vmatprep.mubr.f32.mxu0 0.0
    %241 = vmatmul.mubr.f32.gmra.mxu0 %v154
    %v242 = vpop.f32.mrf.mxu0
    %v243 = vadd.f32 0.0, %v242
    %v244 = vpop.f32.mrf.mxu0
    %245 = vmatprep.mubr.f32.mxu0 0.0
    %246 = vmatmul.mubr.f32.gmra.mxu0 %v155
    %v247 = vpop.f32.mrf.mxu0
    %v248 = vadd.f32 0.0, %v247
    %v249 = vpop.f32.mrf.mxu0
    %250 = vmatprep.mubr.f32.mxu0 0.0
    %251 = vmatmul.mubr.f32.gmra.mxu0 %v156
    %v252 = vpop.f32.mrf.mxu0
    %v253 = vadd.f32 0.0, %v252
    %v254 = vpop.f32.mrf.mxu0
    %255 = vmatprep.mubr.f32.mxu0 0.0
    %256 = vmatmul.mubr.f32.gmra.mxu0 %v157
    %v257 = vpop.f32.mrf.mxu0
    %v258 = vadd.f32 0.0, %v257
    %v259 = vpop.f32.mrf.mxu0
    %260 = vmatprep.mubr.f32.mxu0 0.0
    %261 = vmatmul.mubr.f32.gmra.mxu0 %v158
    %v262 = vpop.f32.mrf.mxu0
    %v263 = vadd.f32 0.0, %v262
    %v264 = vpop.f32.mrf.mxu0
    %265 = vmatprep.mubr.f32.mxu0 0.0
    %266 = vmatmul.mubr.f32.gmra.mxu0 %v159
    %v267 = vpop.f32.mrf.mxu0
    %v268 = vadd.f32 0.0, %v267
    %v269 = vpop.f32.mrf.mxu0
    %270 = vdwg.mxu0
    %271 = vst [vmem:[#allocation2] sm:$0xff] %v243
    %272 = vst [vmem:[#allocation2 + $0x8] sm:$0xff] %v248
    %273 = vst [vmem:[#allocation2 + $0x10] sm:$0xff] %v253
    %274 = vst [vmem:[#allocation2 + $0x18] sm:$0xff] %v258
    %275 = vst [vmem:[#allocation2 + $0x20] sm:$0xff] %v263
    %276 = vst [vmem:[#allocation2 + $0x28] sm:$0x3] %v268
    %v277 = vld [vmem:[#allocation2] sm:$0xff]
    %v278 = vld [vmem:[#allocation2 + $0x8] sm:$0xff]
    %v279 = vld [vmem:[#allocation2 + $0x10] sm:$0xff]
    %v280 = vld [vmem:[#allocation2 + $0x18] sm:$0xff]
    %v281 = vld [vmem:[#allocation2 + $0x20] sm:$0xff]
    %v282 = vld [vmem:[#allocation8 + $0x158] sm:$0xff]
    %v283 = vld [vmem:[#allocation8 + $0x160] sm:$0xff]
    %v284 = vld [vmem:[#allocation8 + $0x168] sm:$0xff]
    %v285 = vld [vmem:[#allocation8 + $0x170] sm:$0xff]
    %v286 = vld [vmem:[#allocation8 + $0x178] sm:$0xff]
    %v287 = vld [vmem:[#allocation8 + $0x180] sm:$0xff]
    %v288 = vld [vmem:[#allocation8 + $0x188] sm:$0xff]
    %v289 = vld [vmem:[#allocation8 + $0x190] sm:$0xff]
    %v290 = vld [vmem:[#allocation8 + $0x198] sm:$0xff]
    %v291 = vld [vmem:[#allocation8 + $0x1a0] sm:$0xff]
    %v292 = vld [vmem:[#allocation8 + $0x1a8] sm:$0xff]
    %v293 = vld [vmem:[#allocation8 + $0x1b0] sm:$0xff]
    %v294 = vld [vmem:[#allocation8 + $0x1b8] sm:$0xff]
    %v295 = vld [vmem:[#allocation8 + $0x1c0] sm:$0xff]
    %v296 = vld [vmem:[#allocation8 + $0x1c8] sm:$0xff]
    %v297 = vld [vmem:[#allocation8 + $0x1d0] sm:$0xff]
    %v298 = vld [vmem:[#allocation2 + $0x1] sm:$0xff]
    %v299 = vld [vmem:[#allocation2 + $0x9] sm:$0xff]
    %v300 = vld [vmem:[#allocation2 + $0x11] sm:$0xff]
    %v301 = vld [vmem:[#allocation2 + $0x19] sm:$0xff]
    %v302 = vld [vmem:[#allocation2 + $0x21] sm:$0xff]
    %v303 = vld [vmem:[#allocation8 + $0x1d8] sm:$0xff]
    %v304 = vld [vmem:[#allocation8 + $0x1e0] sm:$0xff]
    %v305 = vld [vmem:[#allocation8 + $0x1e8] sm:$0xff]
    %v306 = vld [vmem:[#allocation8 + $0x1f0] sm:$0xff]
    %v307 = vld [vmem:[#allocation8 + $0x1f8] sm:$0xff]
    %v308 = vld [vmem:[#allocation8 + $0x200] sm:$0xff]
    %v309 = vld [vmem:[#allocation8 + $0x208] sm:$0xff]
    %v310 = vld [vmem:[#allocation8 + $0x210] sm:$0xff]
    %v311 = vld [vmem:[#allocation8 + $0x218] sm:$0xff]
    %v312 = vld [vmem:[#allocation8 + $0x220] sm:$0xff]
    %v313 = vld [vmem:[#allocation8 + $0x228] sm:$0xff]
    %v314 = vld [vmem:[#allocation8 + $0x230] sm:$0xff]
    %v315 = vld [vmem:[#allocation8 + $0x238] sm:$0xff]
    %v316 = vld [vmem:[#allocation8 + $0x240] sm:$0xff]
    %v317 = vld [vmem:[#allocation8 + $0x248] sm:$0xff]
    %v318 = vld [vmem:[#allocation8 + $0x250] sm:$0xff]
    %319 = vmatprep.subr.mxu0 0.0
    %320 = vmatpush1.msra.mxu0 %v318
    %321 = vmatprep.subr.mxu0 0.0
    %322 = vmatpush1.msra.mxu0 %v317
    %323 = vmatprep.subr.mxu0 0.0
    %324 = vmatpush1.msra.mxu0 %v316
    %325 = vmatprep.subr.mxu0 0.0
    %326 = vmatpush1.msra.mxu0 %v315
    %327 = vmatprep.subr.mxu0 0.0
    %328 = vmatpush1.msra.mxu0 %v314
    %329 = vmatprep.subr.mxu0 0.0
    %330 = vmatpush1.msra.mxu0 %v313
    %331 = vmatprep.subr.mxu0 0.0
    %332 = vmatpush1.msra.mxu0 %v312
    %333 = vmatprep.subr.mxu0 0.0
    %334 = vmatpush1.msra.mxu0 %v311
    %335 = vmatprep.subr.mxu0 0.0
    %336 = vmatpush1.msra.mxu0 %v310
    %337 = vmatprep.subr.mxu0 0.0
    %338 = vmatpush1.msra.mxu0 %v309
    %339 = vmatprep.subr.mxu0 0.0
    %340 = vmatpush1.msra.mxu0 %v308
    %341 = vmatprep.subr.mxu0 0.0
    %342 = vmatpush1.msra.mxu0 %v307
    %343 = vmatprep.subr.mxu0 0.0
    %344 = vmatpush1.msra.mxu0 %v306
    %345 = vmatprep.subr.mxu0 0.0
    %346 = vmatpush1.msra.mxu0 %v305
    %347 = vmatprep.subr.mxu0 0.0
    %348 = vmatpush1.msra.mxu0 %v304
    %349 = vmatprep.subr.mxu0 0.0
    %350 = vmatpush1.msra.mxu0 %v303
    %351 = vmatprep.subr.mxu0 0.0
    %352 = vmatpush2.msra.mxu0 0.0
    %353 = vmatprep.subr.mxu0 0.0
    %354 = vmatpush2.msra.mxu0 0.0
    %355 = vmatprep.subr.mxu0 0.0
    %356 = vmatpush2.msra.mxu0 0.0
    %357 = vmatprep.subr.mxu0 0.0
    %358 = vmatpush2.msra.mxu0 0.0
    %359 = vmatprep.subr.mxu0 0.0
    %360 = vmatpush2.msra.mxu0 0.0
    %361 = vmatprep.subr.mxu0 0.0
    %362 = vmatpush2.msra.mxu0 0.0
    %363 = vmatprep.subr.mxu0 0.0
    %364 = vmatpush2.msra.mxu0 0.0
    %365 = vmatprep.subr.mxu0 0.0
    %366 = vmatpush2.msra.mxu0 0.0
    %367 = vmatprep.subr.mxu0 0.0
    %368 = vmatpush2.msra.mxu0 0.0
    %369 = vmatprep.subr.mxu0 0.0
    %370 = vmatpush2.msra.mxu0 0.0
    %371 = vmatprep.subr.mxu0 0.0
    %372 = vmatpush2.msra.mxu0 0.0
    %373 = vmatprep.subr.mxu0 0.0
    %374 = vmatpush2.msra.mxu0 0.0
    %375 = vmatprep.subr.mxu0 0.0
    %376 = vmatpush2.msra.mxu0 0.0
    %377 = vmatprep.subr.mxu0 0.0
    %378 = vmatpush2.msra.mxu0 0.0
    %379 = vmatprep.subr.mxu0 0.0
    %380 = vmatpush2.msra.mxu0 0.0
    %381 = vmatprep.subr.mxu0 0.0
    %382 = vmatpush2.msra.mxu0 0.0
    %383 = vmatprep.mubr.f32.mxu0 0.0
    %384 = vmatmul.mubr.f32.gmra.mxu0 %v298
    %v385 = vpop.f32.mrf.mxu0
    %v386 = vadd.f32 0.0, %v385
    %v387 = vpop.f32.mrf.mxu0
    %388 = vmatprep.mubr.f32.mxu0 0.0
    %389 = vmatmul.mubr.f32.gmra.mxu0 %v299
    %v390 = vpop.f32.mrf.mxu0
    %v391 = vadd.f32 0.0, %v390
    %v392 = vpop.f32.mrf.mxu0
    %393 = vmatprep.mubr.f32.mxu0 0.0
    %394 = vmatmul.mubr.f32.gmra.mxu0 %v300
    %v395 = vpop.f32.mrf.mxu0
    %v396 = vadd.f32 0.0, %v395
    %v397 = vpop.f32.mrf.mxu0
    %398 = vmatprep.mubr.f32.mxu0 0.0
    %399 = vmatmul.mubr.f32.gmra.mxu0 %v301
    %v400 = vpop.f32.mrf.mxu0
    %v401 = vadd.f32 0.0, %v400
    %v402 = vpop.f32.mrf.mxu0
    %403 = vmatprep.mubr.f32.mxu0 0.0
    %404 = vmatmul.mubr.f32.gmra.mxu0 %v302
    %v405 = vpop.f32.mrf.mxu0
    %v406 = vadd.f32 0.0, %v405
    %v407 = vpop.f32.mrf.mxu0
    %408 = vdwg.mxu0
    %v409 = vld [vmem:[#allocation2 + $0x2] sm:$0xff]
    %v410 = vld [vmem:[#allocation2 + $0xa] sm:$0xff]
    %v411 = vld [vmem:[#allocation2 + $0x12] sm:$0xff]
    %v412 = vld [vmem:[#allocation2 + $0x1a] sm:$0xff]
    %v413 = vld [vmem:[#allocation2 + $0x22] sm:$0xff]
    %v414 = vld [vmem:[#allocation8 + $0x258] sm:$0xff]
    %v415 = vld [vmem:[#allocation8 + $0x260] sm:$0xff]
    %v416 = vld [vmem:[#allocation8 + $0x268] sm:$0xff]
    %v417 = vld [vmem:[#allocation8 + $0x270] sm:$0xff]
    %v418 = vld [vmem:[#allocation8 + $0x278] sm:$0xff]
    %v419 = vld [vmem:[#allocation8 + $0x280] sm:$0xff]
    %v420 = vld [vmem:[#allocation8 + $0x288] sm:$0xff]
    %v421 = vld [vmem:[#allocation8 + $0x290] sm:$0xff]
    %v422 = vld [vmem:[#allocation8 + $0x298] sm:$0xff]
    %v423 = vld [vmem:[#allocation8 + $0x2a0] sm:$0xff]
    %v424 = vld [vmem:[#allocation8 + $0x2a8] sm:$0xff]
    %v425 = vld [vmem:[#allocation8 + $0x2b0] sm:$0xff]
    %v426 = vld [vmem:[#allocation8 + $0x2b8] sm:$0xff]
    %v427 = vld [vmem:[#allocation8 + $0x2c0] sm:$0xff]
    %v428 = vld [vmem:[#allocation8 + $0x2c8] sm:$0xff]
    %v429 = vld [vmem:[#allocation8 + $0x2d0] sm:$0xff]
    %430 = vmatprep.subr.mxu0 0.0
    %431 = vmatpush1.msra.mxu0 %v297
    %432 = vmatprep.subr.mxu0 0.0
    %433 = vmatpush1.msra.mxu0 %v296
    %434 = vmatprep.subr.mxu0 0.0
    %435 = vmatpush1.msra.mxu0 %v295
    %436 = vmatprep.subr.mxu0 0.0
    %437 = vmatpush1.msra.mxu0 %v294
    %438 = vmatprep.subr.mxu0 0.0
    %439 = vmatpush1.msra.mxu0 %v293
    %440 = vmatprep.subr.mxu0 0.0
    %441 = vmatpush1.msra.mxu0 %v292
    %442 = vmatprep.subr.mxu0 0.0
    %443 = vmatpush1.msra.mxu0 %v291
    %444 = vmatprep.subr.mxu0 0.0
    %445 = vmatpush1.msra.mxu0 %v290
    %446 = vmatprep.subr.mxu0 0.0
    %447 = vmatpush1.msra.mxu0 %v289
    %448 = vmatprep.subr.mxu0 0.0
    %449 = vmatpush1.msra.mxu0 %v288
    %450 = vmatprep.subr.mxu0 0.0
    %451 = vmatpush1.msra.mxu0 %v287
    %452 = vmatprep.subr.mxu0 0.0
    %453 = vmatpush1.msra.mxu0 %v286
    %454 = vmatprep.subr.mxu0 0.0
    %455 = vmatpush1.msra.mxu0 %v285
    %456 = vmatprep.subr.mxu0 0.0
    %457 = vmatpush1.msra.mxu0 %v284
    %458 = vmatprep.subr.mxu0 0.0
    %459 = vmatpush1.msra.mxu0 %v283
    %460 = vmatprep.subr.mxu0 0.0
    %461 = vmatpush1.msra.mxu0 %v282
    %462 = vmatprep.subr.mxu0 0.0
    %463 = vmatpush2.msra.mxu0 0.0
    %464 = vmatprep.subr.mxu0 0.0
    %465 = vmatpush2.msra.mxu0 0.0
    %466 = vmatprep.subr.mxu0 0.0
    %467 = vmatpush2.msra.mxu0 0.0
    %468 = vmatprep.subr.mxu0 0.0
    %469 = vmatpush2.msra.mxu0 0.0
    %470 = vmatprep.subr.mxu0 0.0
    %471 = vmatpush2.msra.mxu0 0.0
    %472 = vmatprep.subr.mxu0 0.0
    %473 = vmatpush2.msra.mxu0 0.0
    %474 = vmatprep.subr.mxu0 0.0
    %475 = vmatpush2.msra.mxu0 0.0
    %476 = vmatprep.subr.mxu0 0.0
    %477 = vmatpush2.msra.mxu0 0.0
    %478 = vmatprep.subr.mxu0 0.0
    %479 = vmatpush2.msra.mxu0 0.0
    %480 = vmatprep.subr.mxu0 0.0
    %481 = vmatpush2.msra.mxu0 0.0
    %482 = vmatprep.subr.mxu0 0.0
    %483 = vmatpush2.msra.mxu0 0.0
    %484 = vmatprep.subr.mxu0 0.0
    %485 = vmatpush2.msra.mxu0 0.0
    %486 = vmatprep.subr.mxu0 0.0
    %487 = vmatpush2.msra.mxu0 0.0
    %488 = vmatprep.subr.mxu0 0.0
    %489 = vmatpush2.msra.mxu0 0.0
    %490 = vmatprep.subr.mxu0 0.0
    %491 = vmatpush2.msra.mxu0 0.0
    %492 = vmatprep.subr.mxu0 0.0
    %493 = vmatpush2.msra.mxu0 0.0
    %494 = vmatprep.mubr.f32.mxu0 0.0
    %495 = vmatmul.mubr.f32.gmra.mxu0 %v277
    %v496 = vpop.f32.mrf.mxu0
    %v497 = vadd.f32 %v386, %v496
    %v498 = vpop.f32.mrf.mxu0
    %499 = vmatprep.mubr.f32.mxu0 0.0
    %500 = vmatmul.mubr.f32.gmra.mxu0 %v278
    %v501 = vpop.f32.mrf.mxu0
    %v502 = vadd.f32 %v391, %v501
    %v503 = vpop.f32.mrf.mxu0
    %504 = vmatprep.mubr.f32.mxu0 0.0
    %505 = vmatmul.mubr.f32.gmra.mxu0 %v279
    %v506 = vpop.f32.mrf.mxu0
    %v507 = vadd.f32 %v396, %v506
    %v508 = vpop.f32.mrf.mxu0
    %509 = vmatprep.mubr.f32.mxu0 0.0
    %510 = vmatmul.mubr.f32.gmra.mxu0 %v280
    %v511 = vpop.f32.mrf.mxu0
    %v512 = vadd.f32 %v401, %v511
    %v513 = vpop.f32.mrf.mxu0
    %514 = vmatprep.mubr.f32.mxu0 0.0
    %515 = vmatmul.mubr.f32.gmra.mxu0 %v281
    %v516 = vpop.f32.mrf.mxu0
    %v517 = vadd.f32 %v406, %v516
    %v518 = vpop.f32.mrf.mxu0
    %519 = vdwg.mxu0
    %v520 = vld [vmem:[#allocation8 + $0x2d8] sm:$0x1]
    %v521 = vlaneseq
    %v522 = vshrl.u32 %v521, 7
    %v523 = vsub.s32 0, %v522
    %v524 = vrot.slane %v520, %v523
    %525 = vmatprep.subr.mxu0 0.0
    %526 = vmatpush1.msra.mxu0 %v429
    %527 = vmatprep.subr.mxu0 0.0
    %528 = vmatpush1.msra.mxu0 %v428
    %529 = vmatprep.subr.mxu0 0.0
    %530 = vmatpush1.msra.mxu0 %v427
    %531 = vmatprep.subr.mxu0 0.0
    %532 = vmatpush1.msra.mxu0 %v426
    %533 = vmatprep.subr.mxu0 0.0
    %534 = vmatpush1.msra.mxu0 %v425
    %535 = vmatprep.subr.mxu0 0.0
    %536 = vmatpush1.msra.mxu0 %v424
    %537 = vmatprep.subr.mxu0 0.0
    %538 = vmatpush1.msra.mxu0 %v423
    %539 = vmatprep.subr.mxu0 0.0
    %540 = vmatpush1.msra.mxu0 %v422
    %541 = vmatprep.subr.mxu0 0.0
    %542 = vmatpush1.msra.mxu0 %v421
    %543 = vmatprep.subr.mxu0 0.0
    %544 = vmatpush1.msra.mxu0 %v420
    %545 = vmatprep.subr.mxu0 0.0
    %546 = vmatpush1.msra.mxu0 %v419
    %547 = vmatprep.subr.mxu0 0.0
    %548 = vmatpush1.msra.mxu0 %v418
    %549 = vmatprep.subr.mxu0 0.0
    %550 = vmatpush1.msra.mxu0 %v417
    %551 = vmatprep.subr.mxu0 0.0
    %552 = vmatpush1.msra.mxu0 %v416
    %553 = vmatprep.subr.mxu0 0.0
    %554 = vmatpush1.msra.mxu0 %v415
    %555 = vmatprep.subr.mxu0 0.0
    %556 = vmatpush1.msra.mxu0 %v414
    %557 = vmatprep.subr.mxu0 0.0
    %558 = vmatpush2.msra.mxu0 0.0
    %559 = vmatprep.subr.mxu0 0.0
    %560 = vmatpush2.msra.mxu0 0.0
    %561 = vmatprep.subr.mxu0 0.0
    %562 = vmatpush2.msra.mxu0 0.0
    %563 = vmatprep.subr.mxu0 0.0
    %564 = vmatpush2.msra.mxu0 0.0
    %565 = vmatprep.subr.mxu0 0.0
    %566 = vmatpush2.msra.mxu0 0.0
    %567 = vmatprep.subr.mxu0 0.0
    %568 = vmatpush2.msra.mxu0 0.0
    %569 = vmatprep.subr.mxu0 0.0
    %570 = vmatpush2.msra.mxu0 0.0
    %571 = vmatprep.subr.mxu0 0.0
    %572 = vmatpush2.msra.mxu0 0.0
    %573 = vmatprep.subr.mxu0 0.0
    %574 = vmatpush2.msra.mxu0 0.0
    %575 = vmatprep.subr.mxu0 0.0
    %576 = vmatpush2.msra.mxu0 0.0
    %577 = vmatprep.subr.mxu0 0.0
    %578 = vmatpush2.msra.mxu0 0.0
    %579 = vmatprep.subr.mxu0 0.0
    %580 = vmatpush2.msra.mxu0 0.0
    %581 = vmatprep.subr.mxu0 0.0
    %582 = vmatpush2.msra.mxu0 0.0
    %583 = vmatprep.subr.mxu0 0.0
    %584 = vmatpush2.msra.mxu0 0.0
    %585 = vmatprep.subr.mxu0 0.0
    %586 = vmatpush2.msra.mxu0 0.0
    %587 = vmatprep.subr.mxu0 0.0
    %588 = vmatpush2.msra.mxu0 0.0
    %589 = vmatprep.mubr.f32.mxu0 0.0
    %590 = vmatmul.mubr.f32.gmra.mxu0 %v409
    %v591 = vpop.f32.mrf.mxu0
    %v592 = vadd.f32 %v524, %v591
    %v593 = vpop.f32.mrf.mxu0
    %594 = vmatprep.mubr.f32.mxu0 0.0
    %595 = vmatmul.mubr.f32.gmra.mxu0 %v410
    %v596 = vpop.f32.mrf.mxu0
    %v597 = vadd.f32 %v524, %v596
    %v598 = vpop.f32.mrf.mxu0
    %599 = vmatprep.mubr.f32.mxu0 0.0
    %600 = vmatmul.mubr.f32.gmra.mxu0 %v411
    %v601 = vpop.f32.mrf.mxu0
    %v602 = vadd.f32 %v524, %v601
    %v603 = vpop.f32.mrf.mxu0
    %604 = vmatprep.mubr.f32.mxu0 0.0
    %605 = vmatmul.mubr.f32.gmra.mxu0 %v412
    %v606 = vpop.f32.mrf.mxu0
    %v607 = vadd.f32 %v524, %v606
    %v608 = vpop.f32.mrf.mxu0
    %609 = vmatprep.mubr.f32.mxu0 0.0
    %610 = vmatmul.mubr.f32.gmra.mxu0 %v413
    %v611 = vpop.f32.mrf.mxu0
    %v612 = vadd.f32 %v524, %v611
    %v613 = vpop.f32.mrf.mxu0
    %614 = vdwg.mxu0
    %v615 = vadd.f32 %v497, %v592
    %v616 = vadd.f32 %v502, %v597
    %v617 = vadd.f32 %v507, %v602
    %v618 = vadd.f32 %v512, %v607
    %v619 = vadd.f32 %v517, %v612
    %v620 = vmax.f32 %v615, 0.0
    %v621 = vmax.f32 %v616, 0.0
    %v622 = vmax.f32 %v617, 0.0
    %v623 = vmax.f32 %v618, 0.0
    %v624 = vmax.f32 %v619, 0.0
    %v625 = vld [vmem:[#allocation8 + $0x108] sm:$0xff]
    %v626 = vld [vmem:[#allocation8 + $0x110] sm:$0xff]
    %v627 = vld [vmem:[#allocation8 + $0x118] sm:$0xff]
    %v628 = vld [vmem:[#allocation8 + $0x120] sm:$0xff]
    %v629 = vld [vmem:[#allocation8 + $0x128] sm:$0xff]
    %v630 = vld [vmem:[#allocation8 + $0x130] sm:$0xff]
    %v631 = vld [vmem:[#allocation8 + $0x138] sm:$0xff]
    %v632 = vld [vmem:[#allocation8 + $0x140] sm:$0xff]
    %v633 = vld [vmem:[#allocation8 + $0x148] sm:$0xff]
    %v634 = vld [vmem:[#allocation8 + $0x150] sm:$0x3]
    %vm635 = vcmask 326656
    %v637 = vsel %vm635, %v625, 0
    %v640 = vsel %vm635, %v626, 0
    %v643 = vsel %vm635, %v627, 0
    %v646 = vsel %vm635, %v628, 0
    %v649 = vsel %vm635, %v629, 0
    %v652 = vsel %vm635, %v630, 0
    %v655 = vsel %vm635, %v631, 0
    %v658 = vsel %vm635, %v632, 0
    %v661 = vsel %vm635, %v633, 0
    %v664 = vsel %vm635, %v634, 0
    %666 = vmatprep.subr.mxu0 0.0
    %667 = vmatpush1.msra.mxu0 0.0
    %668 = vmatprep.subr.mxu0 0.0
    %669 = vmatpush1.msra.mxu0 0.0
    %670 = vmatprep.subr.mxu0 0.0
    %671 = vmatpush1.msra.mxu0 0.0
    %672 = vmatprep.subr.mxu0 0.0
    %673 = vmatpush1.msra.mxu0 0.0
    %674 = vmatprep.subr.mxu0 0.0
    %675 = vmatpush1.msra.mxu0 0.0
    %676 = vmatprep.subr.mxu0 0.0
    %677 = vmatpush1.msra.mxu0 0.0
    %678 = vmatprep.subr.mxu0 0.0
    %679 = vmatpush1.msra.mxu0 0.0
    %680 = vmatprep.subr.mxu0 0.0
    %681 = vmatpush1.msra.mxu0 0.0
    %682 = vmatprep.subr.mxu0 0.0
    %683 = vmatpush1.msra.mxu0 0.0
    %684 = vmatprep.subr.mxu0 0.0
    %685 = vmatpush1.msra.mxu0 0.0
    %686 = vmatprep.subr.mxu0 0.0
    %687 = vmatpush1.msra.mxu0 0.0
    %688 = vmatprep.subr.mxu0 0.0
    %689 = vmatpush1.msra.mxu0 %v624
    %690 = vmatprep.subr.mxu0 0.0
    %691 = vmatpush1.msra.mxu0 %v623
    %692 = vmatprep.subr.mxu0 0.0
    %693 = vmatpush1.msra.mxu0 %v622
    %694 = vmatprep.subr.mxu0 0.0
    %695 = vmatpush1.msra.mxu0 %v621
    %696 = vmatprep.subr.mxu0 0.0
    %697 = vmatpush1.msra.mxu0 %v620
    %698 = vmatprep.subr.mxu0 0.0
    %699 = vmatpush2.msra.mxu0 0.0
    %700 = vmatprep.subr.mxu0 0.0
    %701 = vmatpush2.msra.mxu0 0.0
    %702 = vmatprep.subr.mxu0 0.0
    %703 = vmatpush2.msra.mxu0 0.0
    %704 = vmatprep.subr.mxu0 0.0
    %705 = vmatpush2.msra.mxu0 0.0
    %706 = vmatprep.subr.mxu0 0.0
    %707 = vmatpush2.msra.mxu0 0.0
    %708 = vmatprep.subr.mxu0 0.0
    %709 = vmatpush2.msra.mxu0 0.0
    %710 = vmatprep.subr.mxu0 0.0
    %711 = vmatpush2.msra.mxu0 0.0
    %712 = vmatprep.subr.mxu0 0.0
    %713 = vmatpush2.msra.mxu0 0.0
    %714 = vmatprep.subr.mxu0 0.0
    %715 = vmatpush2.msra.mxu0 0.0
    %716 = vmatprep.subr.mxu0 0.0
    %717 = vmatpush2.msra.mxu0 0.0
    %718 = vmatprep.subr.mxu0 0.0
    %719 = vmatpush2.msra.mxu0 0.0
    %720 = vmatprep.subr.mxu0 0.0
    %721 = vmatpush2.msra.mxu0 0.0
    %722 = vmatprep.subr.mxu0 0.0
    %723 = vmatpush2.msra.mxu0 0.0
    %724 = vmatprep.subr.mxu0 0.0
    %725 = vmatpush2.msra.mxu0 0.0
    %726 = vmatprep.subr.mxu0 0.0
    %727 = vmatpush2.msra.mxu0 0.0
    %728 = vmatprep.subr.mxu0 0.0
    %729 = vmatpush2.msra.mxu0 0.0
    %730 = vmatprep.mubr.f32.mxu0 0.0
    %731 = vmatmul.mubr.f32.gmra.mxu0 %v637
    %v732 = vpop.f32.mrf.mxu0
    %v733 = vadd.f32 0.0, %v732
    %v734 = vpop.f32.mrf.mxu0
    %735 = vmatprep.mubr.f32.mxu0 0.0
    %736 = vmatmul.mubr.f32.gmra.mxu0 %v640
    %v737 = vpop.f32.mrf.mxu0
    %v738 = vadd.f32 0.0, %v737
    %v739 = vpop.f32.mrf.mxu0
    %740 = vmatprep.mubr.f32.mxu0 0.0
    %741 = vmatmul.mubr.f32.gmra.mxu0 %v643
    %v742 = vpop.f32.mrf.mxu0
    %v743 = vadd.f32 0.0, %v742
    %v744 = vpop.f32.mrf.mxu0
    %745 = vmatprep.mubr.f32.mxu0 0.0
    %746 = vmatmul.mubr.f32.gmra.mxu0 %v646
    %v747 = vpop.f32.mrf.mxu0
    %v748 = vadd.f32 0.0, %v747
    %v749 = vpop.f32.mrf.mxu0
    %750 = vmatprep.mubr.f32.mxu0 0.0
    %751 = vmatmul.mubr.f32.gmra.mxu0 %v649
    %v752 = vpop.f32.mrf.mxu0
    %v753 = vadd.f32 0.0, %v752
    %v754 = vpop.f32.mrf.mxu0
    %755 = vmatprep.mubr.f32.mxu0 0.0
    %756 = vmatmul.mubr.f32.gmra.mxu0 %v652
    %v757 = vpop.f32.mrf.mxu0
    %v758 = vadd.f32 0.0, %v757
    %v759 = vpop.f32.mrf.mxu0
    %760 = vmatprep.mubr.f32.mxu0 0.0
    %761 = vmatmul.mubr.f32.gmra.mxu0 %v655
    %v762 = vpop.f32.mrf.mxu0
    %v763 = vadd.f32 0.0, %v762
    %v764 = vpop.f32.mrf.mxu0
    %765 = vmatprep.mubr.f32.mxu0 0.0
    %766 = vmatmul.mubr.f32.gmra.mxu0 %v658
    %v767 = vpop.f32.mrf.mxu0
    %v768 = vadd.f32 0.0, %v767
    %v769 = vpop.f32.mrf.mxu0
    %770 = vmatprep.mubr.f32.mxu0 0.0
    %771 = vmatmul.mubr.f32.gmra.mxu0 %v661
    %v772 = vpop.f32.mrf.mxu0
    %v773 = vadd.f32 0.0, %v772
    %v774 = vpop.f32.mrf.mxu0
    %775 = vmatprep.mubr.f32.mxu0 0.0
    %776 = vmatmul.mubr.f32.gmra.mxu0 %v664
    %v777 = vpop.f32.mrf.mxu0
    %v778 = vadd.f32 0.0, %v777
    %v779 = vpop.f32.mrf.mxu0
    %780 = vdwg.mxu0
    %781 = vst [vmem:[#allocation3] sm:$0xff] %v733
    %782 = vst [vmem:[#allocation3 + $0x8] sm:$0xff] %v738
    %783 = vst [vmem:[#allocation3 + $0x10] sm:$0xff] %v743
    %784 = vst [vmem:[#allocation3 + $0x18] sm:$0xff] %v748
    %785 = vst [vmem:[#allocation3 + $0x20] sm:$0xff] %v753
    %786 = vst [vmem:[#allocation3 + $0x28] sm:$0xff] %v758
    %787 = vst [vmem:[#allocation3 + $0x30] sm:$0xff] %v763
    %788 = vst [vmem:[#allocation3 + $0x38] sm:$0xff] %v768
    %789 = vst [vmem:[#allocation3 + $0x40] sm:$0xff] %v773
    %790 = vst [vmem:[#allocation3 + $0x48] sm:$0x3] %v778
    %v791 = vld [vmem:[#allocation3] sm:$0xff]
    %v792 = vld [vmem:[#allocation3 + $0x8] sm:$0xff]
    %v793 = vld [vmem:[#allocation3 + $0x10] sm:$0xff]
    %v794 = vld [vmem:[#allocation3 + $0x18] sm:$0xff]
    %v795 = vld [vmem:[#allocation3 + $0x20] sm:$0xff]
    %v796 = vld [vmem:[#allocation3 + $0x28] sm:$0xff]
    %v797 = vld [vmem:[#allocation3 + $0x30] sm:$0xff]
    %v798 = vld [vmem:[#allocation3 + $0x38] sm:$0xff]
    %v799 = vld [vmem:[#allocation3 + $0x40] sm:$0xff]
    %v800 = vld [vmem:[#allocation8 + $0x2e0] sm:$0xff]
    %v801 = vld [vmem:[#allocation8 + $0x2e8] sm:$0xff]
    %v802 = vld [vmem:[#allocation8 + $0x2f0] sm:$0xff]
    %v803 = vld [vmem:[#allocation8 + $0x2f8] sm:$0xff]
    %v804 = vld [vmem:[#allocation8 + $0x300] sm:$0xff]
    %v805 = vld [vmem:[#allocation8 + $0x308] sm:$0xff]
    %v806 = vld [vmem:[#allocation8 + $0x310] sm:$0xff]
    %v807 = vld [vmem:[#allocation8 + $0x318] sm:$0xff]
    %v808 = vld [vmem:[#allocation8 + $0x320] sm:$0xff]
    %v809 = vld [vmem:[#allocation8 + $0x328] sm:$0xff]
    %v810 = vld [vmem:[#allocation8 + $0x330] sm:$0xff]
    %v811 = vld [vmem:[#allocation8 + $0x338] sm:$0xff]
    %v812 = vld [vmem:[#allocation8 + $0x340] sm:$0xff]
    %v813 = vld [vmem:[#allocation8 + $0x348] sm:$0xff]
    %v814 = vld [vmem:[#allocation8 + $0x350] sm:$0xff]
    %v815 = vld [vmem:[#allocation8 + $0x358] sm:$0xff]
    %v816 = vld [vmem:[#allocation3 + $0x1] sm:$0xff]
    %v817 = vld [vmem:[#allocation3 + $0x9] sm:$0xff]
    %v818 = vld [vmem:[#allocation3 + $0x11] sm:$0xff]
    %v819 = vld [vmem:[#allocation3 + $0x19] sm:$0xff]
    %v820 = vld [vmem:[#allocation3 + $0x21] sm:$0xff]
    %v821 = vld [vmem:[#allocation3 + $0x29] sm:$0xff]
    %v822 = vld [vmem:[#allocation3 + $0x31] sm:$0xff]
    %v823 = vld [vmem:[#allocation3 + $0x39] sm:$0xff]
    %v824 = vld [vmem:[#allocation3 + $0x41] sm:$0xff]
    %v825 = vld [vmem:[#allocation8 + $0x360] sm:$0xff]
    %v826 = vld [vmem:[#allocation8 + $0x368] sm:$0xff]
    %v827 = vld [vmem:[#allocation8 + $0x370] sm:$0xff]
    %v828 = vld [vmem:[#allocation8 + $0x378] sm:$0xff]
    %v829 = vld [vmem:[#allocation8 + $0x380] sm:$0xff]
    %v830 = vld [vmem:[#allocation8 + $0x388] sm:$0xff]
    %v831 = vld [vmem:[#allocation8 + $0x390] sm:$0xff]
    %v832 = vld [vmem:[#allocation8 + $0x398] sm:$0xff]
    %v833 = vld [vmem:[#allocation8 + $0x3a0] sm:$0xff]
    %v834 = vld [vmem:[#allocation8 + $0x3a8] sm:$0xff]
    %v835 = vld [vmem:[#allocation8 + $0x3b0] sm:$0xff]
    %v836 = vld [vmem:[#allocation8 + $0x3b8] sm:$0xff]
    %v837 = vld [vmem:[#allocation8 + $0x3c0] sm:$0xff]
    %v838 = vld [vmem:[#allocation8 + $0x3c8] sm:$0xff]
    %v839 = vld [vmem:[#allocation8 + $0x3d0] sm:$0xff]
    %v840 = vld [vmem:[#allocation8 + $0x3d8] sm:$0xff]
    %841 = vmatprep.subr.mxu0 0.0
    %842 = vmatpush1.msra.mxu0 %v840
    %843 = vmatprep.subr.mxu0 0.0
    %844 = vmatpush1.msra.mxu0 %v839
    %845 = vmatprep.subr.mxu0 0.0
    %846 = vmatpush1.msra.mxu0 %v838
    %847 = vmatprep.subr.mxu0 0.0
    %848 = vmatpush1.msra.mxu0 %v837
    %849 = vmatprep.subr.mxu0 0.0
    %850 = vmatpush1.msra.mxu0 %v836
    %851 = vmatprep.subr.mxu0 0.0
    %852 = vmatpush1.msra.mxu0 %v835
    %853 = vmatprep.subr.mxu0 0.0
    %854 = vmatpush1.msra.mxu0 %v834
    %855 = vmatprep.subr.mxu0 0.0
    %856 = vmatpush1.msra.mxu0 %v833
    %857 = vmatprep.subr.mxu0 0.0
    %858 = vmatpush1.msra.mxu0 %v832
    %859 = vmatprep.subr.mxu0 0.0
    %860 = vmatpush1.msra.mxu0 %v831
    %861 = vmatprep.subr.mxu0 0.0
    %862 = vmatpush1.msra.mxu0 %v830
    %863 = vmatprep.subr.mxu0 0.0
    %864 = vmatpush1.msra.mxu0 %v829
    %865 = vmatprep.subr.mxu0 0.0
    %866 = vmatpush1.msra.mxu0 %v828
    %867 = vmatprep.subr.mxu0 0.0
    %868 = vmatpush1.msra.mxu0 %v827
    %869 = vmatprep.subr.mxu0 0.0
    %870 = vmatpush1.msra.mxu0 %v826
    %871 = vmatprep.subr.mxu0 0.0
    %872 = vmatpush1.msra.mxu0 %v825
    %873 = vmatprep.subr.mxu0 0.0
    %874 = vmatpush2.msra.mxu0 0.0
    %875 = vmatprep.subr.mxu0 0.0
    %876 = vmatpush2.msra.mxu0 0.0
    %877 = vmatprep.subr.mxu0 0.0
    %878 = vmatpush2.msra.mxu0 0.0
    %879 = vmatprep.subr.mxu0 0.0
    %880 = vmatpush2.msra.mxu0 0.0
    %881 = vmatprep.subr.mxu0 0.0
    %882 = vmatpush2.msra.mxu0 0.0
    %883 = vmatprep.subr.mxu0 0.0
    %884 = vmatpush2.msra.mxu0 0.0
    %885 = vmatprep.subr.mxu0 0.0
    %886 = vmatpush2.msra.mxu0 0.0
    %887 = vmatprep.subr.mxu0 0.0
    %888 = vmatpush2.msra.mxu0 0.0
    %889 = vmatprep.subr.mxu0 0.0
    %890 = vmatpush2.msra.mxu0 0.0
    %891 = vmatprep.subr.mxu0 0.0
    %892 = vmatpush2.msra.mxu0 0.0
    %893 = vmatprep.subr.mxu0 0.0
    %894 = vmatpush2.msra.mxu0 0.0
    %895 = vmatprep.subr.mxu0 0.0
    %896 = vmatpush2.msra.mxu0 0.0
    %897 = vmatprep.subr.mxu0 0.0
    %898 = vmatpush2.msra.mxu0 0.0
    %899 = vmatprep.subr.mxu0 0.0
    %900 = vmatpush2.msra.mxu0 0.0
    %901 = vmatprep.subr.mxu0 0.0
    %902 = vmatpush2.msra.mxu0 0.0
    %903 = vmatprep.subr.mxu0 0.0
    %904 = vmatpush2.msra.mxu0 0.0
    %905 = vmatprep.mubr.f32.mxu0 0.0
    %906 = vmatmul.mubr.f32.gmra.mxu0 %v816
    %v907 = vpop.f32.mrf.mxu0
    %v908 = vadd.f32 0.0, %v907
    %v909 = vpop.f32.mrf.mxu0
    %910 = vmatprep.mubr.f32.mxu0 0.0
    %911 = vmatmul.mubr.f32.gmra.mxu0 %v817
    %v912 = vpop.f32.mrf.mxu0
    %v913 = vadd.f32 0.0, %v912
    %v914 = vpop.f32.mrf.mxu0
    %915 = vmatprep.mubr.f32.mxu0 0.0
    %916 = vmatmul.mubr.f32.gmra.mxu0 %v818
    %v917 = vpop.f32.mrf.mxu0
    %v918 = vadd.f32 0.0, %v917
    %v919 = vpop.f32.mrf.mxu0
    %920 = vmatprep.mubr.f32.mxu0 0.0
    %921 = vmatmul.mubr.f32.gmra.mxu0 %v819
    %v922 = vpop.f32.mrf.mxu0
    %v923 = vadd.f32 0.0, %v922
    %v924 = vpop.f32.mrf.mxu0
    %925 = vmatprep.mubr.f32.mxu0 0.0
    %926 = vmatmul.mubr.f32.gmra.mxu0 %v820
    %v927 = vpop.f32.mrf.mxu0
    %v928 = vpop.f32.mrf.mxu0
    %929 = vmatprep.mubr.f32.mxu0 0.0
    %930 = vmatmul.mubr.f32.gmra.mxu0 %v821
    %v931 = vpop.f32.mrf.mxu0
    %v932 = vadd.f32 0.0, %v931
    %v933 = vpop.f32.mrf.mxu0
    %934 = vmatprep.mubr.f32.mxu0 0.0
    %935 = vmatmul.mubr.f32.gmra.mxu0 %v822
    %v936 = vpop.f32.mrf.mxu0
    %v937 = vadd.f32 0.0, %v936
    %v938 = vpop.f32.mrf.mxu0
    %939 = vmatprep.mubr.f32.mxu0 0.0
    %940 = vmatmul.mubr.f32.gmra.mxu0 %v823
    %v941 = vpop.f32.mrf.mxu0
    %v942 = vadd.f32 0.0, %v941
    %v943 = vpop.f32.mrf.mxu0
    %944 = vmatprep.mubr.f32.mxu0 0.0
    %945 = vmatmul.mubr.f32.gmra.mxu0 %v824
    %v946 = vpop.f32.mrf.mxu0
    %v947 = vadd.f32 0.0, %v946
    %v948 = vpop.f32.mrf.mxu0
    %949 = vdwg.mxu0
    %v950 = vld [vmem:[#allocation3 + $0x2] sm:$0xff]
    %v951 = vld [vmem:[#allocation3 + $0xa] sm:$0xff]
    %v952 = vld [vmem:[#allocation3 + $0x12] sm:$0xff]
    %v953 = vld [vmem:[#allocation3 + $0x1a] sm:$0xff]
    %v954 = vld [vmem:[#allocation3 + $0x22] sm:$0xff]
    %v955 = vld [vmem:[#allocation3 + $0x2a] sm:$0xff]
    %v956 = vld [vmem:[#allocation3 + $0x32] sm:$0xff]
    %v957 = vld [vmem:[#allocation3 + $0x3a] sm:$0xff]
    %v958 = vld [vmem:[#allocation3 + $0x42] sm:$0xff]
    %v959 = vld [vmem:[#allocation8 + $0x3e0] sm:$0xff]
    %v960 = vld [vmem:[#allocation8 + $0x3e8] sm:$0xff]
    %v961 = vld [vmem:[#allocation8 + $0x3f0] sm:$0xff]
    %v962 = vld [vmem:[#allocation8 + $0x3f8] sm:$0xff]
    %v963 = vld [vmem:[#allocation8 + $0x400] sm:$0xff]
    %v964 = vld [vmem:[#allocation8 + $0x408] sm:$0xff]
    %v965 = vld [vmem:[#allocation8 + $0x410] sm:$0xff]
    %v966 = vld [vmem:[#allocation8 + $0x418] sm:$0xff]
    %v967 = vld [vmem:[#allocation8 + $0x420] sm:$0xff]
    %v968 = vld [vmem:[#allocation8 + $0x428] sm:$0xff]
    %v969 = vld [vmem:[#allocation8 + $0x430] sm:$0xff]
    %v970 = vld [vmem:[#allocation8 + $0x438] sm:$0xff]
    %v971 = vld [vmem:[#allocation8 + $0x440] sm:$0xff]
    %v972 = vld [vmem:[#allocation8 + $0x448] sm:$0xff]
    %v973 = vld [vmem:[#allocation8 + $0x450] sm:$0xff]
    %v974 = vld [vmem:[#allocation8 + $0x458] sm:$0xff]
    %975 = vmatprep.subr.mxu0 0.0
    %976 = vmatpush1.msra.mxu0 %v815
    %977 = vmatprep.subr.mxu0 0.0
    %978 = vmatpush1.msra.mxu0 %v814
    %979 = vmatprep.subr.mxu0 0.0
    %980 = vmatpush1.msra.mxu0 %v813
    %981 = vmatprep.subr.mxu0 0.0
    %982 = vmatpush1.msra.mxu0 %v812
    %983 = vmatprep.subr.mxu0 0.0
    %984 = vmatpush1.msra.mxu0 %v811
    %985 = vmatprep.subr.mxu0 0.0
    %986 = vmatpush1.msra.mxu0 %v810
    %987 = vmatprep.subr.mxu0 0.0
    %988 = vmatpush1.msra.mxu0 %v809
    %989 = vmatprep.subr.mxu0 0.0
    %990 = vmatpush1.msra.mxu0 %v808
    %991 = vmatprep.subr.mxu0 0.0
    %992 = vmatpush1.msra.mxu0 %v807
    %993 = vmatprep.subr.mxu0 0.0
    %994 = vmatpush1.msra.mxu0 %v806
    %995 = vmatprep.subr.mxu0 0.0
    %996 = vmatpush1.msra.mxu0 %v805
    %997 = vmatprep.subr.mxu0 0.0
    %998 = vmatpush1.msra.mxu0 %v804
    %999 = vmatprep.subr.mxu0 0.0
    %1000 = vmatpush1.msra.mxu0 %v803
    %1001 = vmatprep.subr.mxu0 0.0
    %1002 = vmatpush1.msra.mxu0 %v802
    %1003 = vmatprep.subr.mxu0 0.0
    %1004 = vmatpush1.msra.mxu0 %v801
    %1005 = vmatprep.subr.mxu0 0.0
    %1006 = vmatpush1.msra.mxu0 %v800
    %1007 = vmatprep.subr.mxu0 0.0
    %1008 = vmatpush2.msra.mxu0 0.0
    %1009 = vmatprep.subr.mxu0 0.0
    %1010 = vmatpush2.msra.mxu0 0.0
    %1011 = vmatprep.subr.mxu0 0.0
    %1012 = vmatpush2.msra.mxu0 0.0
    %1013 = vmatprep.subr.mxu0 0.0
    %1014 = vmatpush2.msra.mxu0 0.0
    %1015 = vmatprep.subr.mxu0 0.0
    %1016 = vmatpush2.msra.mxu0 0.0
    %1017 = vmatprep.subr.mxu0 0.0
    %1018 = vmatpush2.msra.mxu0 0.0
    %1019 = vmatprep.subr.mxu0 0.0
    %1020 = vmatpush2.msra.mxu0 0.0
    %1021 = vmatprep.subr.mxu0 0.0
    %1022 = vmatpush2.msra.mxu0 0.0
    %1023 = vmatprep.subr.mxu0 0.0
    %1024 = vmatpush2.msra.mxu0 0.0
    %1025 = vmatprep.subr.mxu0 0.0
    %1026 = vmatpush2.msra.mxu0 0.0
    %1027 = vmatprep.subr.mxu0 0.0
    %1028 = vmatpush2.msra.mxu0 0.0
    %1029 = vmatprep.subr.mxu0 0.0
    %1030 = vmatpush2.msra.mxu0 0.0
    %1031 = vmatprep.subr.mxu0 0.0
    %1032 = vmatpush2.msra.mxu0 0.0
    %1033 = vmatprep.subr.mxu0 0.0
    %1034 = vmatpush2.msra.mxu0 0.0
    %1035 = vmatprep.subr.mxu0 0.0
    %1036 = vmatpush2.msra.mxu0 0.0
    %1037 = vmatprep.subr.mxu0 0.0
    %1038 = vmatpush2.msra.mxu0 0.0
    %1039 = vmatprep.mubr.f32.mxu0 0.0
    %1040 = vmatmul.mubr.f32.gmra.mxu0 %v791
    %v1041 = vpop.f32.mrf.mxu0
    %v1042 = vadd.f32 %v908, %v1041
    %v1043 = vpop.f32.mrf.mxu0
    %1044 = vmatprep.mubr.f32.mxu0 0.0
    %1045 = vmatmul.mubr.f32.gmra.mxu0 %v792
    %v1046 = vpop.f32.mrf.mxu0
    %v1047 = vadd.f32 %v913, %v1046
    %v1048 = vpop.f32.mrf.mxu0
    %1049 = vmatprep.mubr.f32.mxu0 0.0
    %1050 = vmatmul.mubr.f32.gmra.mxu0 %v793
    %v1051 = vpop.f32.mrf.mxu0
    %v1052 = vadd.f32 %v918, %v1051
    %v1053 = vpop.f32.mrf.mxu0
    %1054 = vmatprep.mubr.f32.mxu0 0.0
    %1055 = vmatmul.mubr.f32.gmra.mxu0 %v794
    %v1056 = vpop.f32.mrf.mxu0
    %v1057 = vadd.f32 %v923, %v1056
    %v1058 = vpop.f32.mrf.mxu0
    %1059 = vmatprep.mubr.f32.mxu0 0.0
    %1060 = vmatmul.mubr.f32.gmra.mxu0 %v795
    %v1061 = vpop.f32.mrf.mxu0
    %v1062 = vpop.f32.mrf.mxu0
    %1063 = vmatprep.mubr.f32.mxu0 0.0
    %1064 = vmatmul.mubr.f32.gmra.mxu0 %v796
    %v1065 = vpop.f32.mrf.mxu0
    %v1066 = vadd.f32 %v932, %v1065
    %v1067 = vpop.f32.mrf.mxu0
    %1068 = vmatprep.mubr.f32.mxu0 0.0
    %1069 = vmatmul.mubr.f32.gmra.mxu0 %v797
    %v1070 = vpop.f32.mrf.mxu0
    %v1071 = vadd.f32 %v937, %v1070
    %v1072 = vpop.f32.mrf.mxu0
    %1073 = vmatprep.mubr.f32.mxu0 0.0
    %1074 = vmatmul.mubr.f32.gmra.mxu0 %v798
    %v1075 = vpop.f32.mrf.mxu0
    %v1076 = vadd.f32 %v942, %v1075
    %v1077 = vpop.f32.mrf.mxu0
    %1078 = vmatprep.mubr.f32.mxu0 0.0
    %1079 = vmatmul.mubr.f32.gmra.mxu0 %v799
    %v1080 = vpop.f32.mrf.mxu0
    %v1081 = vadd.f32 %v947, %v1080
    %v1082 = vpop.f32.mrf.mxu0
    %1083 = vdwg.mxu0
    %v1084 = vld [vmem:[#allocation8 + $0x460] sm:$0x1]
    %v1085 = vlaneseq
    %v1086 = vshrl.u32 %v1085, 7
    %v1087 = vsub.s32 0, %v1086
    %v1088 = vrot.slane %v1084, %v1087
    %1089 = vmatprep.subr.mxu0 0.0
    %1090 = vmatpush1.msra.mxu0 %v974
    %1091 = vmatprep.subr.mxu0 0.0
    %1092 = vmatpush1.msra.mxu0 %v973
    %1093 = vmatprep.subr.mxu0 0.0
    %1094 = vmatpush1.msra.mxu0 %v972
    %1095 = vmatprep.subr.mxu0 0.0
    %1096 = vmatpush1.msra.mxu0 %v971
    %1097 = vmatprep.subr.mxu0 0.0
    %1098 = vmatpush1.msra.mxu0 %v970
    %1099 = vmatprep.subr.mxu0 0.0
    %1100 = vmatpush1.msra.mxu0 %v969
    %1101 = vmatprep.subr.mxu0 0.0
    %1102 = vmatpush1.msra.mxu0 %v968
    %1103 = vmatprep.subr.mxu0 0.0
    %1104 = vmatpush1.msra.mxu0 %v967
    %1105 = vmatprep.subr.mxu0 0.0
    %1106 = vmatpush1.msra.mxu0 %v966
    %1107 = vmatprep.subr.mxu0 0.0
    %1108 = vmatpush1.msra.mxu0 %v965
    %1109 = vmatprep.subr.mxu0 0.0
    %1110 = vmatpush1.msra.mxu0 %v964
    %1111 = vmatprep.subr.mxu0 0.0
    %1112 = vmatpush1.msra.mxu0 %v963
    %1113 = vmatprep.subr.mxu0 0.0
    %1114 = vmatpush1.msra.mxu0 %v962
    %1115 = vmatprep.subr.mxu0 0.0
    %1116 = vmatpush1.msra.mxu0 %v961
    %1117 = vmatprep.subr.mxu0 0.0
    %1118 = vmatpush1.msra.mxu0 %v960
    %1119 = vmatprep.subr.mxu0 0.0
    %1120 = vmatpush1.msra.mxu0 %v959
    %1121 = vmatprep.subr.mxu0 0.0
    %1122 = vmatpush2.msra.mxu0 0.0
    %1123 = vmatprep.subr.mxu0 0.0
    %1124 = vmatpush2.msra.mxu0 0.0
    %1125 = vmatprep.subr.mxu0 0.0
    %1126 = vmatpush2.msra.mxu0 0.0
    %1127 = vmatprep.subr.mxu0 0.0
    %1128 = vmatpush2.msra.mxu0 0.0
    %1129 = vmatprep.subr.mxu0 0.0
    %1130 = vmatpush2.msra.mxu0 0.0
    %1131 = vmatprep.subr.mxu0 0.0
    %1132 = vmatpush2.msra.mxu0 0.0
    %1133 = vmatprep.subr.mxu0 0.0
    %1134 = vmatpush2.msra.mxu0 0.0
    %1135 = vmatprep.subr.mxu0 0.0
    %1136 = vmatpush2.msra.mxu0 0.0
    %1137 = vmatprep.subr.mxu0 0.0
    %1138 = vmatpush2.msra.mxu0 0.0
    %1139 = vmatprep.subr.mxu0 0.0
    %1140 = vmatpush2.msra.mxu0 0.0
    %1141 = vmatprep.subr.mxu0 0.0
    %1142 = vmatpush2.msra.mxu0 0.0
    %1143 = vmatprep.subr.mxu0 0.0
    %1144 = vmatpush2.msra.mxu0 0.0
    %1145 = vmatprep.subr.mxu0 0.0
    %1146 = vmatpush2.msra.mxu0 0.0
    %1147 = vmatprep.subr.mxu0 0.0
    %1148 = vmatpush2.msra.mxu0 0.0
    %1149 = vmatprep.subr.mxu0 0.0
    %1150 = vmatpush2.msra.mxu0 0.0
    %1151 = vmatprep.subr.mxu0 0.0
    %1152 = vmatpush2.msra.mxu0 0.0
    %1153 = vmatprep.mubr.f32.mxu0 0.0
    %1154 = vmatmul.mubr.f32.gmra.mxu0 %v950
    %v1155 = vpop.f32.mrf.mxu0
    %v1156 = vadd.f32 %v1088, %v1155
    %v1157 = vpop.f32.mrf.mxu0
    %1158 = vmatprep.mubr.f32.mxu0 0.0
    %1159 = vmatmul.mubr.f32.gmra.mxu0 %v951
    %v1160 = vpop.f32.mrf.mxu0
    %v1161 = vadd.f32 %v1088, %v1160
    %v1162 = vpop.f32.mrf.mxu0
    %1163 = vmatprep.mubr.f32.mxu0 0.0
    %1164 = vmatmul.mubr.f32.gmra.mxu0 %v952
    %v1165 = vpop.f32.mrf.mxu0
    %v1166 = vadd.f32 %v1088, %v1165
    %v1167 = vpop.f32.mrf.mxu0
    %1168 = vmatprep.mubr.f32.mxu0 0.0
    %1169 = vmatmul.mubr.f32.gmra.mxu0 %v953
    %v1170 = vpop.f32.mrf.mxu0
    %v1171 = vadd.f32 %v1088, %v1170
    %v1172 = vpop.f32.mrf.mxu0
    %1173 = vmatprep.mubr.f32.mxu0 0.0
    %1174 = vmatmul.mubr.f32.gmra.mxu0 %v954
    %v1175 = vpop.f32.mrf.mxu0
    %v1176 = vpop.f32.mrf.mxu0
    %1177 = vmatprep.mubr.f32.mxu0 0.0
    %1178 = vmatmul.mubr.f32.gmra.mxu0 %v955
    %v1179 = vpop.f32.mrf.mxu0
    %v1180 = vadd.f32 %v1088, %v1179
    %v1181 = vpop.f32.mrf.mxu0
    %1182 = vmatprep.mubr.f32.mxu0 0.0
    %1183 = vmatmul.mubr.f32.gmra.mxu0 %v956
    %v1184 = vpop.f32.mrf.mxu0
    %v1185 = vadd.f32 %v1088, %v1184
    %v1186 = vpop.f32.mrf.mxu0
    %1187 = vmatprep.mubr.f32.mxu0 0.0
    %1188 = vmatmul.mubr.f32.gmra.mxu0 %v957
    %v1189 = vpop.f32.mrf.mxu0
    %v1190 = vadd.f32 %v1088, %v1189
    %v1191 = vpop.f32.mrf.mxu0
    %1192 = vmatprep.mubr.f32.mxu0 0.0
    %1193 = vmatmul.mubr.f32.gmra.mxu0 %v958
    %v1194 = vpop.f32.mrf.mxu0
    %v1195 = vadd.f32 %v1088, %v1194
    %v1196 = vpop.f32.mrf.mxu0
    %1197 = vdwg.mxu0
    %v1198 = vadd.f32 %v1042, %v1156
    %v1199 = vadd.f32 %v1047, %v1161
    %v1200 = vadd.f32 %v1052, %v1166
    %v1201 = vadd.f32 %v1057, %v1171
    %v1202 = vadd.f32 %v1066, %v1180
    %v1203 = vadd.f32 %v1071, %v1185
    %v1204 = vadd.f32 %v1076, %v1190
    %v1205 = vadd.f32 %v1081, %v1195
    %v1206 = vmax.f32 %v1198, 0.0
    %v1207 = vmax.f32 %v1199, 0.0
    %v1208 = vmax.f32 %v1200, 0.0
    %v1209 = vmax.f32 %v1201, 0.0
    %v1210 = vmax.f32 %v1202, 0.0
    %v1211 = vmax.f32 %v1203, 0.0
    %v1212 = vmax.f32 %v1204, 0.0
    %v1213 = vmax.f32 %v1205, 0.0
    %1214 = vst [vmem:[#allocation4] sm:$0xff] 0.0
    %1215 = vst [vmem:[#allocation4 + $0x8] sm:$0xff] 0.0
    %1216 = vst [vmem:[#allocation4 + $0x10] sm:$0xff] 0.0
    %1217 = vst [vmem:[#allocation4 + $0x18] sm:$0xff] 0.0
    %1218 = vst [vmem:[#allocation4 + $0x20] sm:$0xff] 0.0
    %1219 = vst [vmem:[#allocation4 + $0x28] sm:$0xff] 0.0
    %1220 = vst [vmem:[#allocation4 + $0x30] sm:$0xff] 0.0
    %1221 = vst [vmem:[#allocation4 + $0x38] sm:$0xff] 0.0
    %1222 = vst [vmem:[#allocation4 + $0x40] sm:$0xff] 0.0
    %1223 = vst [vmem:[#allocation4 + $0x48] sm:$0x3] 0.0
    %1224 = vst [vmem:[#allocation4 + $0x1] sm:$0xff] %v1206
    %1225 = vst [vmem:[#allocation4 + $0x9] sm:$0xff] %v1207
    %1226 = vst [vmem:[#allocation4 + $0x11] sm:$0xff] %v1208
    %1227 = vst [vmem:[#allocation4 + $0x19] sm:$0xff] %v1209
    %1228 = vst [vmem:[#allocation4 + $0x29] sm:$0xff] %v1210
    %1229 = vst [vmem:[#allocation4 + $0x31] sm:$0xff] %v1211
    %1230 = vst [vmem:[#allocation4 + $0x39] sm:$0xff] %v1212
    %1231 = vst [vmem:[#allocation4 + $0x41] sm:$0xff] %v1213
    %v1232 = vld [vmem:[#allocation4] sm:$0xff]
    %v1233 = vld [vmem:[#allocation4 + $0x8] sm:$0xff]
    %v1234 = vld [vmem:[#allocation4 + $0x10] sm:$0xff]
    %v1235 = vld [vmem:[#allocation4 + $0x18] sm:$0xff]
    %v1236 = vld [vmem:[#allocation4 + $0x20] sm:$0xff]
    %v1237 = vld [vmem:[#allocation4 + $0x28] sm:$0xff]
    %v1238 = vld [vmem:[#allocation4 + $0x30] sm:$0xff]
    %v1239 = vld [vmem:[#allocation4 + $0x38] sm:$0xff]
    %v1240 = vld [vmem:[#allocation4 + $0x40] sm:$0xff]
    %v1241 = vld [vmem:[#allocation8 + $0x468] sm:$0xff]
    %v1242 = vld [vmem:[#allocation8 + $0x470] sm:$0xff]
    %v1243 = vld [vmem:[#allocation8 + $0x478] sm:$0xff]
    %v1244 = vld [vmem:[#allocation8 + $0x480] sm:$0xff]
    %v1245 = vld [vmem:[#allocation8 + $0x488] sm:$0xff]
    %v1246 = vld [vmem:[#allocation8 + $0x490] sm:$0xff]
    %v1247 = vld [vmem:[#allocation8 + $0x498] sm:$0xff]
    %v1248 = vld [vmem:[#allocation8 + $0x4a0] sm:$0xff]
    %v1249 = vld [vmem:[#allocation8 + $0x4a8] sm:$0xff]
    %v1250 = vld [vmem:[#allocation8 + $0x4b0] sm:$0xff]
    %v1251 = vld [vmem:[#allocation8 + $0x4b8] sm:$0xff]
    %v1252 = vld [vmem:[#allocation8 + $0x4c0] sm:$0xff]
    %v1253 = vld [vmem:[#allocation8 + $0x4c8] sm:$0xff]
    %v1254 = vld [vmem:[#allocation8 + $0x4d0] sm:$0xff]
    %v1255 = vld [vmem:[#allocation8 + $0x4d8] sm:$0xff]
    %v1256 = vld [vmem:[#allocation8 + $0x4e0] sm:$0xff]
    %v1257 = vld [vmem:[#allocation4 + $0x1] sm:$0xff]
    %v1258 = vld [vmem:[#allocation4 + $0x9] sm:$0xff]
    %v1259 = vld [vmem:[#allocation4 + $0x11] sm:$0xff]
    %v1260 = vld [vmem:[#allocation4 + $0x19] sm:$0xff]
    %v1261 = vld [vmem:[#allocation4 + $0x21] sm:$0xff]
    %v1262 = vld [vmem:[#allocation4 + $0x29] sm:$0xff]
    %v1263 = vld [vmem:[#allocation4 + $0x31] sm:$0xff]
    %v1264 = vld [vmem:[#allocation4 + $0x39] sm:$0xff]
    %v1265 = vld [vmem:[#allocation4 + $0x41] sm:$0xff]
    %v1266 = vld [vmem:[#allocation8 + $0x4e8] sm:$0xff]
    %v1267 = vld [vmem:[#allocation8 + $0x4f0] sm:$0xff]
    %v1268 = vld [vmem:[#allocation8 + $0x4f8] sm:$0xff]
    %v1269 = vld [vmem:[#allocation8 + $0x500] sm:$0xff]
    %v1270 = vld [vmem:[#allocation8 + $0x508] sm:$0xff]
    %v1271 = vld [vmem:[#allocation8 + $0x510] sm:$0xff]
    %v1272 = vld [vmem:[#allocation8 + $0x518] sm:$0xff]
    %v1273 = vld [vmem:[#allocation8 + $0x520] sm:$0xff]
    %v1274 = vld [vmem:[#allocation8 + $0x528] sm:$0xff]
    %v1275 = vld [vmem:[#allocation8 + $0x530] sm:$0xff]
    %v1276 = vld [vmem:[#allocation8 + $0x538] sm:$0xff]
    %v1277 = vld [vmem:[#allocation8 + $0x540] sm:$0xff]
    %v1278 = vld [vmem:[#allocation8 + $0x548] sm:$0xff]
    %v1279 = vld [vmem:[#allocation8 + $0x550] sm:$0xff]
    %v1280 = vld [vmem:[#allocation8 + $0x558] sm:$0xff]
    %v1281 = vld [vmem:[#allocation8 + $0x560] sm:$0xff]
    %1282 = vmatprep.subr.mxu0 0.0
    %1283 = vmatpush1.msra.mxu0 %v1281
    %1284 = vmatprep.subr.mxu0 0.0
    %1285 = vmatpush1.msra.mxu0 %v1280
    %1286 = vmatprep.subr.mxu0 0.0
    %1287 = vmatpush1.msra.mxu0 %v1279
    %1288 = vmatprep.subr.mxu0 0.0
    %1289 = vmatpush1.msra.mxu0 %v1278
    %1290 = vmatprep.subr.mxu0 0.0
    %1291 = vmatpush1.msra.mxu0 %v1277
    %1292 = vmatprep.subr.mxu0 0.0
    %1293 = vmatpush1.msra.mxu0 %v1276
    %1294 = vmatprep.subr.mxu0 0.0
    %1295 = vmatpush1.msra.mxu0 %v1275
    %1296 = vmatprep.subr.mxu0 0.0
    %1297 = vmatpush1.msra.mxu0 %v1274
    %1298 = vmatprep.subr.mxu0 0.0
    %1299 = vmatpush1.msra.mxu0 %v1273
    %1300 = vmatprep.subr.mxu0 0.0
    %1301 = vmatpush1.msra.mxu0 %v1272
    %1302 = vmatprep.subr.mxu0 0.0
    %1303 = vmatpush1.msra.mxu0 %v1271
    %1304 = vmatprep.subr.mxu0 0.0
    %1305 = vmatpush1.msra.mxu0 %v1270
    %1306 = vmatprep.subr.mxu0 0.0
    %1307 = vmatpush1.msra.mxu0 %v1269
    %1308 = vmatprep.subr.mxu0 0.0
    %1309 = vmatpush1.msra.mxu0 %v1268
    %1310 = vmatprep.subr.mxu0 0.0
    %1311 = vmatpush1.msra.mxu0 %v1267
    %1312 = vmatprep.subr.mxu0 0.0
    %1313 = vmatpush1.msra.mxu0 %v1266
    %1314 = vmatprep.subr.mxu0 0.0
    %1315 = vmatpush2.msra.mxu0 0.0
    %1316 = vmatprep.subr.mxu0 0.0
    %1317 = vmatpush2.msra.mxu0 0.0
    %1318 = vmatprep.subr.mxu0 0.0
    %1319 = vmatpush2.msra.mxu0 0.0
    %1320 = vmatprep.subr.mxu0 0.0
    %1321 = vmatpush2.msra.mxu0 0.0
    %1322 = vmatprep.subr.mxu0 0.0
    %1323 = vmatpush2.msra.mxu0 0.0
    %1324 = vmatprep.subr.mxu0 0.0
    %1325 = vmatpush2.msra.mxu0 0.0
    %1326 = vmatprep.subr.mxu0 0.0
    %1327 = vmatpush2.msra.mxu0 0.0
    %1328 = vmatprep.subr.mxu0 0.0
    %1329 = vmatpush2.msra.mxu0 0.0
    %1330 = vmatprep.subr.mxu0 0.0
    %1331 = vmatpush2.msra.mxu0 0.0
    %1332 = vmatprep.subr.mxu0 0.0
    %1333 = vmatpush2.msra.mxu0 0.0
    %1334 = vmatprep.subr.mxu0 0.0
    %1335 = vmatpush2.msra.mxu0 0.0
    %1336 = vmatprep.subr.mxu0 0.0
    %1337 = vmatpush2.msra.mxu0 0.0
    %1338 = vmatprep.subr.mxu0 0.0
    %1339 = vmatpush2.msra.mxu0 0.0
    %1340 = vmatprep.subr.mxu0 0.0
    %1341 = vmatpush2.msra.mxu0 0.0
    %1342 = vmatprep.subr.mxu0 0.0
    %1343 = vmatpush2.msra.mxu0 0.0
    %1344 = vmatprep.subr.mxu0 0.0
    %1345 = vmatpush2.msra.mxu0 0.0
    %1346 = vmatprep.mubr.f32.mxu0 0.0
    %1347 = vmatmul.mubr.f32.gmra.mxu0 %v1257
    %v1348 = vpop.f32.mrf.mxu0
    %v1349 = vadd.f32 0.0, %v1348
    %v1350 = vpop.f32.mrf.mxu0
    %1351 = vmatprep.mubr.f32.mxu0 0.0
    %1352 = vmatmul.mubr.f32.gmra.mxu0 %v1258
    %v1353 = vpop.f32.mrf.mxu0
    %v1354 = vadd.f32 0.0, %v1353
    %v1355 = vpop.f32.mrf.mxu0
    %1356 = vmatprep.mubr.f32.mxu0 0.0
    %1357 = vmatmul.mubr.f32.gmra.mxu0 %v1259
    %v1358 = vpop.f32.mrf.mxu0
    %v1359 = vadd.f32 0.0, %v1358
    %v1360 = vpop.f32.mrf.mxu0
    %1361 = vmatprep.mubr.f32.mxu0 0.0
    %1362 = vmatmul.mubr.f32.gmra.mxu0 %v1260
    %v1363 = vpop.f32.mrf.mxu0
    %v1364 = vadd.f32 0.0, %v1363
    %v1365 = vpop.f32.mrf.mxu0
    %1366 = vmatprep.mubr.f32.mxu0 0.0
    %1367 = vmatmul.mubr.f32.gmra.mxu0 %v1261
    %v1368 = vpop.f32.mrf.mxu0
    %v1369 = vpop.f32.mrf.mxu0
    %1370 = vmatprep.mubr.f32.mxu0 0.0
    %1371 = vmatmul.mubr.f32.gmra.mxu0 %v1262
    %v1372 = vpop.f32.mrf.mxu0
    %v1373 = vadd.f32 0.0, %v1372
    %v1374 = vpop.f32.mrf.mxu0
    %1375 = vmatprep.mubr.f32.mxu0 0.0
    %1376 = vmatmul.mubr.f32.gmra.mxu0 %v1263
    %v1377 = vpop.f32.mrf.mxu0
    %v1378 = vadd.f32 0.0, %v1377
    %v1379 = vpop.f32.mrf.mxu0
    %1380 = vmatprep.mubr.f32.mxu0 0.0
    %1381 = vmatmul.mubr.f32.gmra.mxu0 %v1264
    %v1382 = vpop.f32.mrf.mxu0
    %v1383 = vadd.f32 0.0, %v1382
    %v1384 = vpop.f32.mrf.mxu0
    %1385 = vmatprep.mubr.f32.mxu0 0.0
    %1386 = vmatmul.mubr.f32.gmra.mxu0 %v1265
    %v1387 = vpop.f32.mrf.mxu0
    %v1388 = vadd.f32 0.0, %v1387
    %v1389 = vpop.f32.mrf.mxu0
    %1390 = vdwg.mxu0
    %v1391 = vld [vmem:[#allocation4 + $0x2] sm:$0xff]
    %v1392 = vld [vmem:[#allocation4 + $0xa] sm:$0xff]
    %v1393 = vld [vmem:[#allocation4 + $0x12] sm:$0xff]
    %v1394 = vld [vmem:[#allocation4 + $0x1a] sm:$0xff]
    %v1395 = vld [vmem:[#allocation4 + $0x22] sm:$0xff]
    %v1396 = vld [vmem:[#allocation4 + $0x2a] sm:$0xff]
    %v1397 = vld [vmem:[#allocation4 + $0x32] sm:$0xff]
    %v1398 = vld [vmem:[#allocation4 + $0x3a] sm:$0xff]
    %v1399 = vld [vmem:[#allocation4 + $0x42] sm:$0xff]
    %v1400 = vld [vmem:[#allocation8 + $0x568] sm:$0xff]
    %v1401 = vld [vmem:[#allocation8 + $0x570] sm:$0xff]
    %v1402 = vld [vmem:[#allocation8 + $0x578] sm:$0xff]
    %v1403 = vld [vmem:[#allocation8 + $0x580] sm:$0xff]
    %v1404 = vld [vmem:[#allocation8 + $0x588] sm:$0xff]
    %v1405 = vld [vmem:[#allocation8 + $0x590] sm:$0xff]
    %v1406 = vld [vmem:[#allocation8 + $0x598] sm:$0xff]
    %v1407 = vld [vmem:[#allocation8 + $0x5a0] sm:$0xff]
    %v1408 = vld [vmem:[#allocation8 + $0x5a8] sm:$0xff]
    %v1409 = vld [vmem:[#allocation8 + $0x5b0] sm:$0xff]
    %v1410 = vld [vmem:[#allocation8 + $0x5b8] sm:$0xff]
    %v1411 = vld [vmem:[#allocation8 + $0x5c0] sm:$0xff]
    %v1412 = vld [vmem:[#allocation8 + $0x5c8] sm:$0xff]
    %v1413 = vld [vmem:[#allocation8 + $0x5d0] sm:$0xff]
    %v1414 = vld [vmem:[#allocation8 + $0x5d8] sm:$0xff]
    %v1415 = vld [vmem:[#allocation8 + $0x5e0] sm:$0xff]
    %1416 = vmatprep.subr.mxu0 0.0
    %1417 = vmatpush1.msra.mxu0 %v1256
    %1418 = vmatprep.subr.mxu0 0.0
    %1419 = vmatpush1.msra.mxu0 %v1255
    %1420 = vmatprep.subr.mxu0 0.0
    %1421 = vmatpush1.msra.mxu0 %v1254
    %1422 = vmatprep.subr.mxu0 0.0
    %1423 = vmatpush1.msra.mxu0 %v1253
    %1424 = vmatprep.subr.mxu0 0.0
    %1425 = vmatpush1.msra.mxu0 %v1252
    %1426 = vmatprep.subr.mxu0 0.0
    %1427 = vmatpush1.msra.mxu0 %v1251
    %1428 = vmatprep.subr.mxu0 0.0
    %1429 = vmatpush1.msra.mxu0 %v1250
    %1430 = vmatprep.subr.mxu0 0.0
    %1431 = vmatpush1.msra.mxu0 %v1249
    %1432 = vmatprep.subr.mxu0 0.0
    %1433 = vmatpush1.msra.mxu0 %v1248
    %1434 = vmatprep.subr.mxu0 0.0
    %1435 = vmatpush1.msra.mxu0 %v1247
    %1436 = vmatprep.subr.mxu0 0.0
    %1437 = vmatpush1.msra.mxu0 %v1246
    %1438 = vmatprep.subr.mxu0 0.0
    %1439 = vmatpush1.msra.mxu0 %v1245
    %1440 = vmatprep.subr.mxu0 0.0
    %1441 = vmatpush1.msra.mxu0 %v1244
    %1442 = vmatprep.subr.mxu0 0.0
    %1443 = vmatpush1.msra.mxu0 %v1243
    %1444 = vmatprep.subr.mxu0 0.0
    %1445 = vmatpush1.msra.mxu0 %v1242
    %1446 = vmatprep.subr.mxu0 0.0
    %1447 = vmatpush1.msra.mxu0 %v1241
    %1448 = vmatprep.subr.mxu0 0.0
    %1449 = vmatpush2.msra.mxu0 0.0
    %1450 = vmatprep.subr.mxu0 0.0
    %1451 = vmatpush2.msra.mxu0 0.0
    %1452 = vmatprep.subr.mxu0 0.0
    %1453 = vmatpush2.msra.mxu0 0.0
    %1454 = vmatprep.subr.mxu0 0.0
    %1455 = vmatpush2.msra.mxu0 0.0
    %1456 = vmatprep.subr.mxu0 0.0
    %1457 = vmatpush2.msra.mxu0 0.0
    %1458 = vmatprep.subr.mxu0 0.0
    %1459 = vmatpush2.msra.mxu0 0.0
    %1460 = vmatprep.subr.mxu0 0.0
    %1461 = vmatpush2.msra.mxu0 0.0
    %1462 = vmatprep.subr.mxu0 0.0
    %1463 = vmatpush2.msra.mxu0 0.0
    %1464 = vmatprep.subr.mxu0 0.0
    %1465 = vmatpush2.msra.mxu0 0.0
    %1466 = vmatprep.subr.mxu0 0.0
    %1467 = vmatpush2.msra.mxu0 0.0
    %1468 = vmatprep.subr.mxu0 0.0
    %1469 = vmatpush2.msra.mxu0 0.0
    %1470 = vmatprep.subr.mxu0 0.0
    %1471 = vmatpush2.msra.mxu0 0.0
    %1472 = vmatprep.subr.mxu0 0.0
    %1473 = vmatpush2.msra.mxu0 0.0
    %1474 = vmatprep.subr.mxu0 0.0
    %1475 = vmatpush2.msra.mxu0 0.0
    %1476 = vmatprep.subr.mxu0 0.0
    %1477 = vmatpush2.msra.mxu0 0.0
    %1478 = vmatprep.subr.mxu0 0.0
    %1479 = vmatpush2.msra.mxu0 0.0
    %1480 = vmatprep.mubr.f32.mxu0 0.0
    %1481 = vmatmul.mubr.f32.gmra.mxu0 %v1232
    %v1482 = vpop.f32.mrf.mxu0
    %v1483 = vadd.f32 %v1349, %v1482
    %v1484 = vpop.f32.mrf.mxu0
    %1485 = vmatprep.mubr.f32.mxu0 0.0
    %1486 = vmatmul.mubr.f32.gmra.mxu0 %v1233
    %v1487 = vpop.f32.mrf.mxu0
    %v1488 = vadd.f32 %v1354, %v1487
    %v1489 = vpop.f32.mrf.mxu0
    %1490 = vmatprep.mubr.f32.mxu0 0.0
    %1491 = vmatmul.mubr.f32.gmra.mxu0 %v1234
    %v1492 = vpop.f32.mrf.mxu0
    %v1493 = vadd.f32 %v1359, %v1492
    %v1494 = vpop.f32.mrf.mxu0
    %1495 = vmatprep.mubr.f32.mxu0 0.0
    %1496 = vmatmul.mubr.f32.gmra.mxu0 %v1235
    %v1497 = vpop.f32.mrf.mxu0
    %v1498 = vadd.f32 %v1364, %v1497
    %v1499 = vpop.f32.mrf.mxu0
    %1500 = vmatprep.mubr.f32.mxu0 0.0
    %1501 = vmatmul.mubr.f32.gmra.mxu0 %v1236
    %v1502 = vpop.f32.mrf.mxu0
    %v1503 = vpop.f32.mrf.mxu0
    %1504 = vmatprep.mubr.f32.mxu0 0.0
    %1505 = vmatmul.mubr.f32.gmra.mxu0 %v1237
    %v1506 = vpop.f32.mrf.mxu0
    %v1507 = vadd.f32 %v1373, %v1506
    %v1508 = vpop.f32.mrf.mxu0
    %1509 = vmatprep.mubr.f32.mxu0 0.0
    %1510 = vmatmul.mubr.f32.gmra.mxu0 %v1238
    %v1511 = vpop.f32.mrf.mxu0
    %v1512 = vadd.f32 %v1378, %v1511
    %v1513 = vpop.f32.mrf.mxu0
    %1514 = vmatprep.mubr.f32.mxu0 0.0
    %1515 = vmatmul.mubr.f32.gmra.mxu0 %v1239
    %v1516 = vpop.f32.mrf.mxu0
    %v1517 = vadd.f32 %v1383, %v1516
    %v1518 = vpop.f32.mrf.mxu0
    %1519 = vmatprep.mubr.f32.mxu0 0.0
    %1520 = vmatmul.mubr.f32.gmra.mxu0 %v1240
    %v1521 = vpop.f32.mrf.mxu0
    %v1522 = vadd.f32 %v1388, %v1521
    %v1523 = vpop.f32.mrf.mxu0
    %1524 = vdwg.mxu0
    %v1525 = vld [vmem:[#allocation8 + $0x5e8] sm:$0x1]
    %v1526 = vlaneseq
    %v1527 = vshrl.u32 %v1526, 7
    %v1528 = vsub.s32 0, %v1527
    %v1529 = vrot.slane %v1525, %v1528
    %1530 = vmatprep.subr.mxu0 0.0
    %1531 = vmatpush1.msra.mxu0 %v1415
    %1532 = vmatprep.subr.mxu0 0.0
    %1533 = vmatpush1.msra.mxu0 %v1414
    %1534 = vmatprep.subr.mxu0 0.0
    %1535 = vmatpush1.msra.mxu0 %v1413
    %1536 = vmatprep.subr.mxu0 0.0
    %1537 = vmatpush1.msra.mxu0 %v1412
    %1538 = vmatprep.subr.mxu0 0.0
    %1539 = vmatpush1.msra.mxu0 %v1411
    %1540 = vmatprep.subr.mxu0 0.0
    %1541 = vmatpush1.msra.mxu0 %v1410
    %1542 = vmatprep.subr.mxu0 0.0
    %1543 = vmatpush1.msra.mxu0 %v1409
    %1544 = vmatprep.subr.mxu0 0.0
    %1545 = vmatpush1.msra.mxu0 %v1408
    %1546 = vmatprep.subr.mxu0 0.0
    %1547 = vmatpush1.msra.mxu0 %v1407
    %1548 = vmatprep.subr.mxu0 0.0
    %1549 = vmatpush1.msra.mxu0 %v1406
    %1550 = vmatprep.subr.mxu0 0.0
    %1551 = vmatpush1.msra.mxu0 %v1405
    %1552 = vmatprep.subr.mxu0 0.0
    %1553 = vmatpush1.msra.mxu0 %v1404
    %1554 = vmatprep.subr.mxu0 0.0
    %1555 = vmatpush1.msra.mxu0 %v1403
    %1556 = vmatprep.subr.mxu0 0.0
    %1557 = vmatpush1.msra.mxu0 %v1402
    %1558 = vmatprep.subr.mxu0 0.0
    %1559 = vmatpush1.msra.mxu0 %v1401
    %1560 = vmatprep.subr.mxu0 0.0
    %1561 = vmatpush1.msra.mxu0 %v1400
    %1562 = vmatprep.subr.mxu0 0.0
    %1563 = vmatpush2.msra.mxu0 0.0
    %1564 = vmatprep.subr.mxu0 0.0
    %1565 = vmatpush2.msra.mxu0 0.0
    %1566 = vmatprep.subr.mxu0 0.0
    %1567 = vmatpush2.msra.mxu0 0.0
    %1568 = vmatprep.subr.mxu0 0.0
    %1569 = vmatpush2.msra.mxu0 0.0
    %1570 = vmatprep.subr.mxu0 0.0
    %1571 = vmatpush2.msra.mxu0 0.0
    %1572 = vmatprep.subr.mxu0 0.0
    %1573 = vmatpush2.msra.mxu0 0.0
    %1574 = vmatprep.subr.mxu0 0.0
    %1575 = vmatpush2.msra.mxu0 0.0
    %1576 = vmatprep.subr.mxu0 0.0
    %1577 = vmatpush2.msra.mxu0 0.0
    %1578 = vmatprep.subr.mxu0 0.0
    %1579 = vmatpush2.msra.mxu0 0.0
    %1580 = vmatprep.subr.mxu0 0.0
    %1581 = vmatpush2.msra.mxu0 0.0
    %1582 = vmatprep.subr.mxu0 0.0
    %1583 = vmatpush2.msra.mxu0 0.0
    %1584 = vmatprep.subr.mxu0 0.0
    %1585 = vmatpush2.msra.mxu0 0.0
    %1586 = vmatprep.subr.mxu0 0.0
    %1587 = vmatpush2.msra.mxu0 0.0
    %1588 = vmatprep.subr.mxu0 0.0
    %1589 = vmatpush2.msra.mxu0 0.0
    %1590 = vmatprep.subr.mxu0 0.0
    %1591 = vmatpush2.msra.mxu0 0.0
    %1592 = vmatprep.subr.mxu0 0.0
    %1593 = vmatpush2.msra.mxu0 0.0
    %1594 = vmatprep.mubr.f32.mxu0 0.0
    %1595 = vmatmul.mubr.f32.gmra.mxu0 %v1391
    %v1596 = vpop.f32.mrf.mxu0
    %v1597 = vadd.f32 %v1529, %v1596
    %v1598 = vpop.f32.mrf.mxu0
    %1599 = vmatprep.mubr.f32.mxu0 0.0
    %1600 = vmatmul.mubr.f32.gmra.mxu0 %v1392
    %v1601 = vpop.f32.mrf.mxu0
    %v1602 = vadd.f32 %v1529, %v1601
    %v1603 = vpop.f32.mrf.mxu0
    %1604 = vmatprep.mubr.f32.mxu0 0.0
    %1605 = vmatmul.mubr.f32.gmra.mxu0 %v1393
    %v1606 = vpop.f32.mrf.mxu0
    %v1607 = vadd.f32 %v1529, %v1606
    %v1608 = vpop.f32.mrf.mxu0
    %1609 = vmatprep.mubr.f32.mxu0 0.0
    %1610 = vmatmul.mubr.f32.gmra.mxu0 %v1394
    %v1611 = vpop.f32.mrf.mxu0
    %v1612 = vadd.f32 %v1529, %v1611
    %v1613 = vpop.f32.mrf.mxu0
    %1614 = vmatprep.mubr.f32.mxu0 0.0
    %1615 = vmatmul.mubr.f32.gmra.mxu0 %v1395
    %v1616 = vpop.f32.mrf.mxu0
    %v1617 = vpop.f32.mrf.mxu0
    %1618 = vmatprep.mubr.f32.mxu0 0.0
    %1619 = vmatmul.mubr.f32.gmra.mxu0 %v1396
    %v1620 = vpop.f32.mrf.mxu0
    %v1621 = vadd.f32 %v1529, %v1620
    %v1622 = vpop.f32.mrf.mxu0
    %1623 = vmatprep.mubr.f32.mxu0 0.0
    %1624 = vmatmul.mubr.f32.gmra.mxu0 %v1397
    %v1625 = vpop.f32.mrf.mxu0
    %v1626 = vadd.f32 %v1529, %v1625
    %v1627 = vpop.f32.mrf.mxu0
    %1628 = vmatprep.mubr.f32.mxu0 0.0
    %1629 = vmatmul.mubr.f32.gmra.mxu0 %v1398
    %v1630 = vpop.f32.mrf.mxu0
    %v1631 = vadd.f32 %v1529, %v1630
    %v1632 = vpop.f32.mrf.mxu0
    %1633 = vmatprep.mubr.f32.mxu0 0.0
    %1634 = vmatmul.mubr.f32.gmra.mxu0 %v1399
    %v1635 = vpop.f32.mrf.mxu0
    %v1636 = vadd.f32 %v1529, %v1635
    %v1637 = vpop.f32.mrf.mxu0
    %1638 = vdwg.mxu0
    %v1639 = vadd.f32 %v1483, %v1597
    %v1640 = vadd.f32 %v1488, %v1602
    %v1641 = vadd.f32 %v1493, %v1607
    %v1642 = vadd.f32 %v1498, %v1612
    %v1643 = vadd.f32 %v1507, %v1621
    %v1644 = vadd.f32 %v1512, %v1626
    %v1645 = vadd.f32 %v1517, %v1631
    %v1646 = vadd.f32 %v1522, %v1636
    %1647 = vst [vmem:[#allocation10] sm:$0xff] %v1639
    %1648 = vst [vmem:[#allocation10 + $0x8] sm:$0xff] %v1640
    %1649 = vst [vmem:[#allocation10 + $0x10] sm:$0xff] %v1641
    %1650 = vst [vmem:[#allocation10 + $0x18] sm:$0xff] %v1642
    %s1651 = scalar_lea.vmem [#allocation10], 32
    %1652 = vst [vmem:[%s1651] sm:$0xff] %v1643
    %1653 = vst [vmem:[%s1651 + $0x8] sm:$0xff] %v1644
    %1654 = vst [vmem:[%s1651 + $0x10] sm:$0xff] %v1645
    %1655 = vst [vmem:[%s1651 + $0x18] sm:$0xff] %v1646
    // Predicated region
    $region18: #{tpu_custom_call.1} parent=1 // pred_check
      _
    $region19: #{tpu_custom_call.1} parent=1 // pred_check_branch
      %1657 = sbr.rel (0) target = $region21
    $region20: #{tpu_custom_call.1} parent=1 // pred_region
      %s1659 = ssub.s32 1024, 1024
      %1660 = vsyncadd [#allocation7], %s1659
      %s1661 = sshll.u32 [#allocation10], 4
      %s1662 = int_to_ptr.vmem [resolvable:$true] %s1661
      %1667 = dma.vmem_to_hbm [thread:$0]  %s1662, 1024, %s2, [#allocation7], 128, 128, 8
    $region21: #{tpu_custom_call.1} parent=1 // pred_fallthru
      _
    // Predicated region
    $region22: #{tpu_custom_call.1} parent=1 // pred_check
      _
    $region23: #{tpu_custom_call.1} parent=1 // pred_check_branch
      %1669 = sbr.rel (0) target = $region25
    $region24: #{tpu_custom_call.1} parent=1 // pred_region
      %1670 = dma.done [#allocation7], 1024
    $region25: #{tpu_custom_call.1} parent=1 // pred_fallthru
      _
    %1671 = vsyncpa [#allocation6], 1
    %1672 = vsyncpa [#allocation9], 1
    %1673 = vsyncpa [#allocation7], 1

</llo_original>
